<compile_context>
chip_gen: v7x
topology: tpu7x:2x2x1
jax: 0.10.0
libtpu: 0.0.40
codegen_flags: <defaults>
</compile_context>

<pallas_src>
import numpy as np
import jax
import jax.numpy as jnp
from jax.experimental import pallas as pl
from jax.experimental.pallas import tpu as pltpu

LANE = 128     # TPU lane width; latent dim and flat dim padded to this
SUBLANE = 8


def _round_up(n, m):
    return ((n + m - 1) // m) * m


def _largest_divisor_tile(total, maximum, multiple):
    """Largest multiple of `multiple` that divides `total` and is <= maximum."""
    best = None
    t = multiple
    cap = min(total, maximum)
    while t <= cap:
        if total % t == 0:
            best = t
        t += multiple
    return best


def _pick_batch_tile(B, tb_max):
    """Pick (TB, B_pad). Prefer B_pad == B (no crop) and >= 2 grid steps."""
    if B <= SUBLANE:
        return B, B                        # single full-batch block (block == full dim)
    # exact divisor of B, multiple of 8, leaving >= 2 steps if possible
    half_cap = max(SUBLANE, B // 2)
    tb = _largest_divisor_tile(B, min(tb_max, half_cap), SUBLANE)
    if tb is None:
        tb = _largest_divisor_tile(B, tb_max, SUBLANE)
    if tb is not None:
        return tb, B
    # fall back to a padded batch (post-kernel crop); still aim for >= 2 steps
    tb = min(tb_max, max(SUBLANE, _round_up(-(-B // 2), SUBLANE)))
    return tb, _round_up(B, tb)


def _pick_f_tile(FP, tn_max):
    """Decoder output-column tile: multiple of 128 dividing FP, <= tn_max."""
    if FP <= tn_max:
        return FP
    tn = _largest_divisor_tile(FP, tn_max, LANE)
    return tn if tn is not None else FP


def vae_kernel(x_ref, wenc_ref, benc_ref, wdec_ref, bdec_ref, eps_ref,
               recon_ref, enc_ref, z_scratch):
    j = pl.program_id(1)   # decoder output-column tile index

    @pl.when(j == 0)
    def _():
        # Encoder (full-F contraction) + reparameterize, once per batch tile.
        x = x_ref[...].astype(jnp.bfloat16)              # cast hidden under DMA
        enc = jnp.dot(x, wenc_ref[...], preferred_element_type=jnp.float32)
        enc = enc + benc_ref[...]
        enc_ref[...] = enc                               # fused (mu | logvar), f32

        lp = z_scratch.shape[-1]                         # padded latent (=128)
        mu = enc[:, :lp]
        logvar = enc[:, lp:]
        std = jnp.exp(0.5 * logvar)
        z_scratch[...] = mu + eps_ref[...] * std         # f32 reparameterize

    # Decoder: one lane-dense column tile of the reconstruction per grid step.
    z = z_scratch[...].astype(wdec_ref.dtype)
    recon = jnp.dot(z, wdec_ref[...], preferred_element_type=jnp.float32)
    recon_ref[...] = (recon + bdec_ref[...]).astype(recon_ref.dtype)


def prepare_weights(params):
    """One-time prep: transpose, fuse mu/logvar, pad latent & flat dims, bf16."""
    L, F = params["w_mu"].shape
    LP = _round_up(L, LANE)
    FP = _round_up(F, LANE)

    w_enc = jnp.zeros((FP, 2 * LP), jnp.float32)
    w_enc = w_enc.at[:F, :L].set(params["w_mu"].T)
    w_enc = w_enc.at[:F, LP:LP + L].set(params["w_logvar"].T)

    b_enc = jnp.zeros((1, 2 * LP), jnp.float32)
    b_enc = b_enc.at[:, :L].set(params["b_mu"][None, :])
    b_enc = b_enc.at[:, LP:LP + L].set(params["b_logvar"][None, :])

    w_dec = jnp.zeros((LP, FP), jnp.float32)
    w_dec = w_dec.at[:L, :F].set(params["w_dec"].T)

    b_dec = jnp.zeros((1, FP), jnp.float32)
    b_dec = b_dec.at[:, :F].set(params["b_dec"][None, :])

    return {
        "w_enc": w_enc.astype(jnp.bfloat16),   # (FP, 2*LP)
        "b_enc": b_enc,                        # (1, 2*LP) f32
        "w_dec": w_dec.astype(jnp.bfloat16),   # (LP, FP)
        "b_dec": b_dec,                        # (1, FP) f32
        "latent_dim": L, "lp": LP, "flat": F, "fp": FP,
    }


def vae_forward(x, prep, eps, *, tb_max=512, tn_max=2048,
                recon_dtype=jnp.bfloat16):
    """x: (B, C, H, W) float32, eps: (B, L) float32.
    Returns (reconstruction (B,C,H,W), mu (B,L), logvar (B,L))."""
    B, C, H, W = x.shape
    F = C * H * W
    assert F == prep["flat"]
    L, LP, FP = prep["latent_dim"], prep["lp"], prep["fp"]

    TB, B_pad = _pick_batch_tile(B, tb_max)
    TN = _pick_f_tile(FP, tn_max)

    # x stays f32 here (cast to bf16 inside the kernel); pad only if needed.
    x_flat = x.reshape(B, F)
    if B_pad != B or FP != F:
        x_flat = jnp.pad(x_flat, ((0, B_pad - B), (0, FP - F)))

    # TODO(synk): torch.randn_like draws eps inside reparameterize each call;
    # here eps is an explicit (deterministic, testable) input.
    eps_pad = jnp.pad(eps.astype(jnp.float32), ((0, B_pad - B), (0, LP - L)))

    grid = (B_pad // TB, FP // TN)

    # Explicit VMEM budget: double-buffered streamed blocks + resident weights.
    recon_bytes = np.dtype(recon_dtype).itemsize
    vmem_bytes = (2 * (TB * FP * 4 + TB * TN * recon_bytes
                       + TB * 2 * LP * 4 + TB * LP * 4)
                  + FP * 2 * LP * 2 + LP * TN * 2
                  + 2 * LP * 4 + TN * 4 + TB * LP * 4 + (4 << 20))
    vmem_limit = int(min(max(vmem_bytes, 32 << 20), 60 << 20))

    recon_pad, enc_pad = pl.pallas_call(
        vae_kernel,
        grid=grid,
        in_specs=[
            pl.BlockSpec((TB, FP), lambda i, j: (i, 0)),       # x (resident over j)
            pl.BlockSpec((FP, 2 * LP), lambda i, j: (0, 0)),   # fused enc weight
            pl.BlockSpec((1, 2 * LP), lambda i, j: (0, 0)),    # fused enc bias
            pl.BlockSpec((LP, TN), lambda i, j: (0, j)),       # dec weight col tile
            pl.BlockSpec((1, TN), lambda i, j: (0, j)),        # dec bias col tile
            pl.BlockSpec((TB, LP), lambda i, j: (i, 0)),       # eps
        ],
        out_specs=[
            pl.BlockSpec((TB, TN), lambda i, j: (i, j)),       # reconstruction
            pl.BlockSpec((TB, 2 * LP), lambda i, j: (i, 0)),   # fused (mu|logvar)
        ],
        out_shape=[
            jax.ShapeDtypeStruct((B_pad, FP), recon_dtype),
            jax.ShapeDtypeStruct((B_pad, 2 * LP), jnp.float32),
        ],
        scratch_shapes=[pltpu.VMEM((TB, LP), jnp.float32)],    # z, reused over j
        compiler_params=pltpu.CompilerParams(
            dimension_semantics=("parallel", "arbitrary"),
            vmem_limit_bytes=vmem_limit),
    )(x_flat, prep["w_enc"], prep["b_enc"], prep["w_dec"], prep["b_dec"],
      eps_pad)

    if B_pad != B or FP != F:
        recon_pad = recon_pad[:B, :F]
    reconstruction = recon_pad.reshape(B, C, H, W)
    mu = enc_pad[:B, :L]
    logvar = enc_pad[:B, LP:LP + L]
    return reconstruction, mu, logvar


def init_params(key, flat_size, latent_dim):
    """Deterministic nn.Linear-style init (uniform +-1/sqrt(fan_in))."""
    ks = jax.random.split(key, 6)

    def lin(kw, kb, out_f, in_f):
        bound = 1.0 / jnp.sqrt(in_f)
        w = jax.random.uniform(kw, (out_f, in_f), jnp.float32, -bound, bound)
        b = jax.random.uniform(kb, (out_f,), jnp.float32, -bound, bound)
        return w, b

    w_mu, b_mu = lin(ks[0], ks[1], latent_dim, flat_size)
    w_lv, b_lv = lin(ks[2], ks[3], latent_dim, flat_size)
    w_dec, b_dec = lin(ks[4], ks[5], flat_size, latent_dim)
    return {
        "w_mu": w_mu, "b_mu": b_mu,
        "w_logvar": w_lv, "b_logvar": b_lv,
        "w_dec": w_dec, "b_dec": b_dec,
    }


if __name__ == "__main__":
    B, C, H, W = 2, 4, 16, 16
    LATENT = 32
    FLAT = C * H * W

    key = jax.random.PRNGKey(0)
    k_x, k_eps, k_p = jax.random.split(key, 3)

    x = jax.random.normal(k_x, (B, C, H, W), jnp.float32)
    eps = jax.random.normal(k_eps, (B, LATENT), jnp.float32)
    params = init_params(k_p, FLAT, LATENT)

    prep = prepare_weights(params)          # one-time weight prep (hoisted)
    recon, mu, logvar = vae_forward(x, prep, eps)
    jax.block_until_ready((recon, mu, logvar))

    # Plain-JAX f32 reference; kernel matmuls are bf16 w/ f32 accumulation and
    # the reconstruction is stored in bf16, so tolerances are loosened.
    x_flat = x.reshape(B, FLAT)
    mu_ref = x_flat @ params["w_mu"].T + params["b_mu"]
    lv_ref = x_flat @ params["w_logvar"].T + params["b_logvar"]
    z_ref = mu_ref + eps * jnp.exp(0.5 * lv_ref)
    rec_ref = (z_ref @ params["w_dec"].T + params["b_dec"]).reshape(B, C, H, W)

    assert recon.shape == (B, C, H, W)
    assert mu.shape == (B, LATENT) and logvar.shape == (B, LATENT)
    assert jnp.allclose(mu, mu_ref, atol=2e-2, rtol=2e-2)
    assert jnp.allclose(logvar, lv_ref, atol=2e-2, rtol=2e-2)
    assert jnp.allclose(recon.astype(jnp.float32), rec_ref, atol=5e-2, rtol=5e-2)

    print("KERNEL_OK")
</pallas_src>

<mosaic_0001>
module attributes {stable_mosaic.version = 11 : i64} {
  func.func @vae_kernel(%arg0: i32, %arg1: i32, %arg2: memref<2x1024xf32, #tpu.memory_space<vmem>>, %arg3: memref<1024x256xbf16, #tpu.memory_space<vmem>>, %arg4: memref<1x256xf32, #tpu.memory_space<vmem>>, %arg5: memref<128x1024xbf16, #tpu.memory_space<vmem>>, %arg6: memref<1x1024xf32, #tpu.memory_space<vmem>>, %arg7: memref<2x128xf32, #tpu.memory_space<vmem>>, %arg8: memref<2x1024xbf16, #tpu.memory_space<vmem>>, %arg9: memref<2x256xf32, #tpu.memory_space<vmem>>, %arg10: memref<2x128xf32, #tpu.memory_space<vmem>>) attributes {dimension_semantics = [#tpu.dimension_semantics<parallel>, #tpu.dimension_semantics<arbitrary>], iteration_bounds = array<i64: 1, 1>, scalar_prefetch = 0 : i64, scratch_operands = 1 : i64, tpu.core_type = #tpu.core_type<tc>, window_params = [{transform_indices = @transform_0, window_bounds = array<i64: 2, 1024>}, {pipeline_mode = #tpu.pipeline_mode<synchronous>, transform_indices = @transform_1, window_bounds = array<i64: 1024, 256>}, {pipeline_mode = #tpu.pipeline_mode<synchronous>, transform_indices = @transform_2, window_bounds = array<i64: 1, 256>}, {transform_indices = @transform_3, window_bounds = array<i64: 128, 1024>}, {transform_indices = @transform_4, window_bounds = array<i64: 1, 1024>}, {transform_indices = @transform_5, window_bounds = array<i64: 2, 128>}, {transform_indices = @transform_6, window_bounds = array<i64: 2, 1024>}, {transform_indices = @transform_7, window_bounds = array<i64: 2, 256>}]} {
    %c0_i32 = arith.constant 0 : i32
    %0 = arith.cmpi eq, %arg1, %c0_i32 : i32
    %1 = arith.extui %0 : i1 to i32
    %c0_i32_0 = arith.constant 0 : i32
    %2 = arith.cmpi ne, %1, %c0_i32_0 : i32
    scf.if %2 {
      %c0_8 = arith.constant 0 : index
      %c0_9 = arith.constant 0 : index
      %12 = vector.load %arg2[%c0_8, %c0_9] : memref<2x1024xf32, #tpu.memory_space<vmem>>, vector<2x1024xf32>
      %13 = arith.truncf %12 : vector<2x1024xf32> to vector<2x1024xbf16>
      %c0_10 = arith.constant 0 : index
      %c0_11 = arith.constant 0 : index
      %14 = vector.load %arg3[%c0_10, %c0_11] : memref<1024x256xbf16, #tpu.memory_space<vmem>>, vector<1024x256xbf16>
      %cst_12 = arith.constant dense<0.000000e+00> : vector<2x256xf32>
      %15 = tpu.matmul %13, %14, %cst_12 {dimension_numbers = #tpu.dot_dimension_numbers<[1], [0], [0], [1], [0, 0, 1, 1], [], []>} : vector<2x1024xbf16>, vector<1024x256xbf16>, vector<2x256xf32> -> vector<2x256xf32>
      %c0_13 = arith.constant 0 : index
      %c0_14 = arith.constant 0 : index
      %16 = vector.load %arg4[%c0_13, %c0_14] : memref<1x256xf32, #tpu.memory_space<vmem>>, vector<1x256xf32>
      %17 = vector.broadcast %16 : vector<1x256xf32> to vector<2x256xf32>
      %18 = arith.addf %15, %17 : vector<2x256xf32>
      %c0_15 = arith.constant 0 : index
      %c0_16 = arith.constant 0 : index
      %19 = vector.load %arg9[%c0_15, %c0_16] : memref<2x256xf32, #tpu.memory_space<vmem>>, vector<2x256xf32>
      tpu.vector_store %arg9[%c0_15, %c0_16], %18 {strides = array<i32>} : memref<2x256xf32, #tpu.memory_space<vmem>>, vector<2x256xf32>,
      %20 = vector.extract_strided_slice %18 {offsets = [0, 0], sizes = [2, 128], strides = [1, 1]} : vector<2x256xf32> to vector<2x128xf32>
      %21 = vector.extract_strided_slice %18 {offsets = [0, 128], sizes = [2, 128], strides = [1, 1]} : vector<2x256xf32> to vector<2x128xf32>
      %cst_17 = arith.constant 5.000000e-01 : f32
      %22 = vector.broadcast %cst_17 : f32 to vector<2x128xf32>
      %23 = arith.mulf %22, %21 : vector<2x128xf32>
      %24 = math.exp %23 : vector<2x128xf32>
      %c0_18 = arith.constant 0 : index
      %c0_19 = arith.constant 0 : index
      %25 = vector.load %arg7[%c0_18, %c0_19] : memref<2x128xf32, #tpu.memory_space<vmem>>, vector<2x128xf32>
      %26 = arith.mulf %25, %24 : vector<2x128xf32>
      %27 = arith.addf %20, %26 : vector<2x128xf32>
      %c0_20 = arith.constant 0 : index
      %c0_21 = arith.constant 0 : index
      %28 = vector.load %arg10[%c0_20, %c0_21] : memref<2x128xf32, #tpu.memory_space<vmem>>, vector<2x128xf32>
      tpu.vector_store %arg10[%c0_20, %c0_21], %27 {strides = array<i32>} : memref<2x128xf32, #tpu.memory_space<vmem>>, vector<2x128xf32>,
    } else {
    }
    %c0 = arith.constant 0 : index
    %c0_1 = arith.constant 0 : index
    %3 = vector.load %arg10[%c0, %c0_1] : memref<2x128xf32, #tpu.memory_space<vmem>>, vector<2x128xf32>
    %4 = arith.truncf %3 : vector<2x128xf32> to vector<2x128xbf16>
    %c0_2 = arith.constant 0 : index
    %c0_3 = arith.constant 0 : index
    %5 = vector.load %arg5[%c0_2, %c0_3] : memref<128x1024xbf16, #tpu.memory_space<vmem>>, vector<128x1024xbf16>
    %cst = arith.constant dense<0.000000e+00> : vector<2x1024xf32>
    %6 = tpu.matmul %4, %5, %cst {dimension_numbers = #tpu.dot_dimension_numbers<[1], [0], [0], [1], [0, 0, 1, 1], [], []>} : vector<2x128xbf16>, vector<128x1024xbf16>, vector<2x1024xf32> -> vector<2x1024xf32>
    %c0_4 = arith.constant 0 : index
    %c0_5 = arith.constant 0 : index
    %7 = vector.load %arg6[%c0_4, %c0_5] : memref<1x1024xf32, #tpu.memory_space<vmem>>, vector<1x1024xf32>
    %8 = vector.broadcast %7 : vector<1x1024xf32> to vector<2x1024xf32>
    %9 = arith.addf %6, %8 : vector<2x1024xf32>
    %10 = arith.truncf %9 : vector<2x1024xf32> to vector<2x1024xbf16>
    %c0_6 = arith.constant 0 : index
    %c0_7 = arith.constant 0 : index
    %11 = vector.load %arg8[%c0_6, %c0_7] : memref<2x1024xbf16, #tpu.memory_space<vmem>>, vector<2x1024xbf16>
    tpu.vector_store %arg8[%c0_6, %c0_7], %10 {strides = array<i32>} : memref<2x1024xbf16, #tpu.memory_space<vmem>>, vector<2x1024xbf16>,
    return
  }
  func.func @transform_0(%arg0: i32, %arg1: i32) -> (i32, i32) {
    %c0_i32 = arith.constant 0 : i32
    %c0_i32_0 = arith.constant 0 : i32
    return %arg0, %c0_i32 : i32, i32
  }
  func.func @transform_1(%arg0: i32, %arg1: i32) -> (i32, i32) {
    %c0_i32 = arith.constant 0 : i32
    %c0_i32_0 = arith.constant 0 : i32
    %c0_i32_1 = arith.constant 0 : i32
    return %c0_i32, %c0_i32_0 : i32, i32
  }
  func.func @transform_2(%arg0: i32, %arg1: i32) -> (i32, i32) {
    %c0_i32 = arith.constant 0 : i32
    %c0_i32_0 = arith.constant 0 : i32
    %c0_i32_1 = arith.constant 0 : i32
    return %c0_i32, %c0_i32_0 : i32, i32
  }
  func.func @transform_3(%arg0: i32, %arg1: i32) -> (i32, i32) {
    %c0_i32 = arith.constant 0 : i32
    %c0_i32_0 = arith.constant 0 : i32
    return %c0_i32, %arg1 : i32, i32
  }
  func.func @transform_4(%arg0: i32, %arg1: i32) -> (i32, i32) {
    %c0_i32 = arith.constant 0 : i32
    %c0_i32_0 = arith.constant 0 : i32
    return %c0_i32, %arg1 : i32, i32
  }
  func.func @transform_5(%arg0: i32, %arg1: i32) -> (i32, i32) {
    %c0_i32 = arith.constant 0 : i32
    %c0_i32_0 = arith.constant 0 : i32
    return %arg0, %c0_i32 : i32, i32
  }
  func.func @transform_6(%arg0: i32, %arg1: i32) -> (i32, i32) {
    %c0_i32 = arith.constant 0 : i32
    return %arg0, %arg1 : i32, i32
  }
  func.func @transform_7(%arg0: i32, %arg1: i32) -> (i32, i32) {
    %c0_i32 = arith.constant 0 : i32
    %c0_i32_0 = arith.constant 0 : i32
    return %arg0, %c0_i32 : i32, i32
  }
}

</mosaic_0001>

<llo_original>
// kernel: tpu_custom_call.1
$region0: #{tpu_custom_call.1}
  #allocation0 [shape = 'u32[]', space=smem, size = 0x4, offset = 0x4, fixed_abs, tag = 'smem constant byte address 0x4 - core index']
  #allocation1 [shape = 'u32[144,128]{1,0:T(1,128)}', space=vmem, size = 0x12000, scoped, tag = 'internal scratch']
  #allocation2 [shape = 'f32[2,128]{1,0:T(2,128)}', space=vmem, size = 0x400, scoped, tag = 'scratch operand']
  %s0 = inlined_call_operand.hbm [shape: f32[2,1024], index: 0, kind: input, shape index: {}]
  %s1 = inlined_call_operand.hbm [shape: bf16[1024,256], index: 1, kind: input, shape index: {}]
  %s2 = inlined_call_operand.vmem [shape: f32[1,256], index: 2, kind: input, shape index: {}]
  %s3 = inlined_call_operand.hbm [shape: bf16[128,1024], index: 3, kind: input, shape index: {}]
  %s4 = inlined_call_operand.vmem [shape: f32[1,1024], index: 4, kind: input, shape index: {}]
  %s5 = inlined_call_operand.vmem [shape: f32[2,128], index: 5, kind: input, shape index: {}]
  %s6 = inlined_call_operand.hbm [shape: bf16[2,1024], index: 6, kind: output, shape index: {0}]
  %s7 = inlined_call_operand.hbm [shape: f32[2,256], index: 7, kind: output, shape index: {1}]
  %8 = xla_tuple %s6, %s7
  %s9 = sld [smem:[#allocation0]]
  $region58: #{tpu_custom_call.1} parent=0
    _
  %s11 = ssub.s32 1, %s9
  %s12 = scalar_select 0, %s11, %s9
  $region1: #{tpu_custom_call.1} parent=0
    #allocation3 [shape = 'u8[8192]{0}', space=vmem, size = 0x2000, scoped, tag = 'input window, operand 0, single buffered']
    #allocation4 [shape = 's32[1]{0}', space=sflag, size = 0x4, scoped, tag = 'scoped memory for tpu_custom_call.1']
    #allocation5 [shape = 's32[1]{0}', space=sflag, size = 0x4, scoped, tag = 'scoped memory for tpu_custom_call.1']
    #allocation6 [shape = 'u8[524288]{0}', space=vmem, size = 0x80000, scoped, tag = 'input window, operand 1, single buffered']
    #allocation7 [shape = 's32[1]{0}', space=sflag, size = 0x4, scoped, tag = 'scoped memory for tpu_custom_call.1']
    #allocation8 [shape = 'u8[262144]{0}', space=vmem, size = 0x40000, scoped, tag = 'input window, operand 3, single buffered']
    #allocation9 [shape = 'u8[4096]{0}', space=vmem, size = 0x1000, scoped, tag = 'output window, operand 0, single buffered']
    #allocation10 [shape = 'u8[2048]{0}', space=vmem, size = 0x800, scoped, tag = 'output window, operand 1, single buffered']
    #allocation11 [shape = 's32[1]{0}', space=sflag, size = 0x4, scoped, tag = 'scoped memory for tpu_custom_call.1']
    %13 = vsyncpa [#allocation4], 0
    %14 = vsyncpa [#allocation7], 0
    %15 = vsyncpa [#allocation5], 0
    %16 = vsyncpa [#allocation11], 0
    // Predicated region
    $region2: #{tpu_custom_call.1} parent=1 // pred_check
      _
    $region3: #{tpu_custom_call.1} parent=1 // pred_check_branch
      %18 = sbr.rel (0) target = $region5
    $region4: #{tpu_custom_call.1} parent=1 // pred_region
      %s20 = ssub.s32 256, 256
      %21 = vsyncadd [#allocation4], %s20
      %s23 = sshll.u32 [#allocation3], 4
      %s24 = int_to_ptr.vmem [resolvable:$true] %s23
      %26 = dma.hbm_to_vmem [thread:$0]  %s0, 256, %s24, [#allocation4]
    $region5: #{tpu_custom_call.1} parent=1 // pred_fallthru
      _
    // Predicated region
    $region6: #{tpu_custom_call.1} parent=1 // pred_check
      _
    $region7: #{tpu_custom_call.1} parent=1 // pred_check_branch
      %28 = sbr.rel (0) target = $region9
    $region8: #{tpu_custom_call.1} parent=1 // pred_region
      %s30 = ssub.s32 16384, 16384
      %31 = vsyncadd [#allocation7], %s30
      %s32 = sshll.u32 [#allocation6], 4
      %s33 = int_to_ptr.vmem [resolvable:$true] %s32
      %38 = dma.hbm_to_vmem [thread:$0]  %s1, 16384, %s33, [#allocation7], 128, 128, 8
    $region9: #{tpu_custom_call.1} parent=1 // pred_fallthru
      _
    // Predicated region
    $region10: #{tpu_custom_call.1} parent=1 // pred_check
      _
    $region11: #{tpu_custom_call.1} parent=1 // pred_check_branch
      %40 = sbr.rel (0) target = $region13
    $region12: #{tpu_custom_call.1} parent=1 // pred_region
      _
    $region13: #{tpu_custom_call.1} parent=1 // pred_fallthru
      _
    // Predicated region
    $region14: #{tpu_custom_call.1} parent=1 // pred_check
      _
    $region15: #{tpu_custom_call.1} parent=1 // pred_check_branch
      %42 = sbr.rel (0) target = $region17
    $region16: #{tpu_custom_call.1} parent=1 // pred_region
      %s44 = ssub.s32 8192, 8192
      %45 = vsyncadd [#allocation7], %s44
      %s46 = sshll.u32 [#allocation8], 4
      %s47 = int_to_ptr.vmem [resolvable:$true] %s46
      %52 = dma.hbm_to_vmem [thread:$0]  %s3, 8192, %s47, [#allocation7], 512, 512, 32
    $region17: #{tpu_custom_call.1} parent=1 // pred_fallthru
      _
    // Predicated region
    $region18: #{tpu_custom_call.1} parent=1 // pred_check
      _
    $region19: #{tpu_custom_call.1} parent=1 // pred_check_branch
      %54 = sbr.rel (0) target = $region21
    $region20: #{tpu_custom_call.1} parent=1 // pred_region
      _
    $region21: #{tpu_custom_call.1} parent=1 // pred_fallthru
      _
    // Predicated region
    $region22: #{tpu_custom_call.1} parent=1 // pred_check
      _
    $region23: #{tpu_custom_call.1} parent=1 // pred_check_branch
      %56 = sbr.rel (0) target = $region25
    $region24: #{tpu_custom_call.1} parent=1 // pred_region
      _
    $region25: #{tpu_custom_call.1} parent=1 // pred_fallthru
      _
    // Predicated region
    $region26: #{tpu_custom_call.1} parent=1 // pred_check
      _
    $region27: #{tpu_custom_call.1} parent=1 // pred_check_branch
      %58 = sbr.rel (0) target = $region29
    $region28: #{tpu_custom_call.1} parent=1 // pred_region
      %59 = dma.done [#allocation4], 256
    $region29: #{tpu_custom_call.1} parent=1 // pred_fallthru
      _
    // Predicated region
    $region30: #{tpu_custom_call.1} parent=1 // pred_check
      _
    $region31: #{tpu_custom_call.1} parent=1 // pred_check_branch
      %61 = sbr.rel (0) target = $region33
    $region32: #{tpu_custom_call.1} parent=1 // pred_region
      %62 = dma.done [#allocation7], 16384
    $region33: #{tpu_custom_call.1} parent=1 // pred_fallthru
      _
    // Predicated region
    $region34: #{tpu_custom_call.1} parent=1 // pred_check
      _
    $region35: #{tpu_custom_call.1} parent=1 // pred_check_branch
      %64 = sbr.rel (0) target = $region37
    $region36: #{tpu_custom_call.1} parent=1 // pred_region
      %65 = dma.done [#allocation7], 8192
    $region37: #{tpu_custom_call.1} parent=1 // pred_fallthru
      _
    %p67 = scmp.eq.s32.totalorder 0, 0
    // Predicated region
    $region38: #{tpu_custom_call.1} parent=1 // pred_check
      %p68 = pneg %p67
    $region39: #{tpu_custom_call.1} parent=1 // pred_check_branch
      %70 = sbr.rel (%p68) target = $region41
    $region40: #{tpu_custom_call.1} parent=1 // pred_region
      %v71 = vld [vmem:[#allocation3] sm:$0xff]
      %v72 = vld [vmem:[#allocation3 + $0x8] sm:$0xff]
      %v75 = vcombine.high %v71, %v71
      %v77 = vunpack.c.l.s4 1983009808
      %v78 = vunpack.c.0.s8 %v77
      %v79 = vlaneseq
      %v80 = vshrl.u32 %v79, 7
      %v81 = vsub.s32 %v78, %v80
      %v82 = vrot.slane %v71, %v81
      %v84 = vunpack.c.l.s4 1983009808
      %v85 = vunpack.c.0.s8 %v84
      %v86 = vlaneseq
      %v87 = vshrl.u32 %v86, 7
      %v88 = vsub.s32 %v85, %v87
      %v89 = vrot.slane %v75, %v88
      %v90 = vcombine.high %v82, %v82
      %v91 = vcombine.high %v89, %v89
      %v92 = vcombine.high %v72, %v72
      %v94 = vunpack.c.l.s4 1983009808
      %v95 = vunpack.c.0.s8 %v94
      %v96 = vlaneseq
      %v97 = vshrl.u32 %v96, 7
      %v98 = vsub.s32 %v95, %v97
      %v99 = vrot.slane %v72, %v98
      %v101 = vunpack.c.l.s4 1983009808
      %v102 = vunpack.c.0.s8 %v101
      %v103 = vlaneseq
      %v104 = vshrl.u32 %v103, 7
      %v105 = vsub.s32 %v102, %v104
      %v106 = vrot.slane %v92, %v105
      %v107 = vcombine.high %v99, %v99
      %v108 = vcombine.high %v106, %v106
      %v117 = vpack.c.bf16 %v82, %v82
      %v118 = vpack.c.bf16 %v90, %v90
      %v119 = vpack.c.bf16 %v89, %v89
      %v120 = vpack.c.bf16 %v91, %v91
      %v121 = vpack.c.bf16 %v99, %v99
      %v122 = vpack.c.bf16 %v107, %v107
      %v123 = vpack.c.bf16 %v106, %v106
      %v124 = vpack.c.bf16 %v108, %v108
      %v125 = vld [vmem:[#allocation6] sm:$0xff]
      %v126 = vld [vmem:[#allocation6 + $0x8] sm:$0xff]
      %v127 = vld [vmem:[#allocation6 + $0x10] sm:$0xff]
      %v128 = vld [vmem:[#allocation6 + $0x18] sm:$0xff]
      %v129 = vld [vmem:[#allocation6 + $0x20] sm:$0xff]
      %v130 = vld [vmem:[#allocation6 + $0x28] sm:$0xff]
      %v131 = vld [vmem:[#allocation6 + $0x30] sm:$0xff]
      %v132 = vld [vmem:[#allocation6 + $0x38] sm:$0xff]
      %v133 = vld [vmem:[#allocation6 + $0x40] sm:$0xff]
      %v134 = vld [vmem:[#allocation6 + $0x48] sm:$0xff]
      %v135 = vld [vmem:[#allocation6 + $0x50] sm:$0xff]
      %v136 = vld [vmem:[#allocation6 + $0x58] sm:$0xff]
      %v137 = vld [vmem:[#allocation6 + $0x60] sm:$0xff]
      %v138 = vld [vmem:[#allocation6 + $0x68] sm:$0xff]
      %v139 = vld [vmem:[#allocation6 + $0x70] sm:$0xff]
      %v140 = vld [vmem:[#allocation6 + $0x78] sm:$0xff]
      %v141 = vld [vmem:[#allocation6 + $0x80] sm:$0xff]
      %v142 = vld [vmem:[#allocation6 + $0x88] sm:$0xff]
      %v143 = vld [vmem:[#allocation6 + $0x90] sm:$0xff]
      %v144 = vld [vmem:[#allocation6 + $0x98] sm:$0xff]
      %v145 = vld [vmem:[#allocation6 + $0xa0] sm:$0xff]
      %v146 = vld [vmem:[#allocation6 + $0xa8] sm:$0xff]
      %v147 = vld [vmem:[#allocation6 + $0xb0] sm:$0xff]
      %v148 = vld [vmem:[#allocation6 + $0xb8] sm:$0xff]
      %v149 = vld [vmem:[#allocation6 + $0xc0] sm:$0xff]
      %v150 = vld [vmem:[#allocation6 + $0xc8] sm:$0xff]
      %v151 = vld [vmem:[#allocation6 + $0xd0] sm:$0xff]
      %v152 = vld [vmem:[#allocation6 + $0xd8] sm:$0xff]
      %v153 = vld [vmem:[#allocation6 + $0xe0] sm:$0xff]
      %v154 = vld [vmem:[#allocation6 + $0xe8] sm:$0xff]
      %v155 = vld [vmem:[#allocation6 + $0xf0] sm:$0xff]
      %v156 = vld [vmem:[#allocation6 + $0xf8] sm:$0xff]
      %v157 = vld [vmem:[#allocation6 + $0x100] sm:$0xff]
      %v158 = vld [vmem:[#allocation6 + $0x108] sm:$0xff]
      %v159 = vld [vmem:[#allocation6 + $0x110] sm:$0xff]
      %v160 = vld [vmem:[#allocation6 + $0x118] sm:$0xff]
      %v161 = vld [vmem:[#allocation6 + $0x120] sm:$0xff]
      %v162 = vld [vmem:[#allocation6 + $0x128] sm:$0xff]
      %v163 = vld [vmem:[#allocation6 + $0x130] sm:$0xff]
      %v164 = vld [vmem:[#allocation6 + $0x138] sm:$0xff]
      %v165 = vld [vmem:[#allocation6 + $0x140] sm:$0xff]
      %v166 = vld [vmem:[#allocation6 + $0x148] sm:$0xff]
      %v167 = vld [vmem:[#allocation6 + $0x150] sm:$0xff]
      %v168 = vld [vmem:[#allocation6 + $0x158] sm:$0xff]
      %v169 = vld [vmem:[#allocation6 + $0x160] sm:$0xff]
      %v170 = vld [vmem:[#allocation6 + $0x168] sm:$0xff]
      %v171 = vld [vmem:[#allocation6 + $0x170] sm:$0xff]
      %v172 = vld [vmem:[#allocation6 + $0x178] sm:$0xff]
      %v173 = vld [vmem:[#allocation6 + $0x180] sm:$0xff]
      %v174 = vld [vmem:[#allocation6 + $0x188] sm:$0xff]
      %v175 = vld [vmem:[#allocation6 + $0x190] sm:$0xff]
      %v176 = vld [vmem:[#allocation6 + $0x198] sm:$0xff]
      %v177 = vld [vmem:[#allocation6 + $0x1a0] sm:$0xff]
      %v178 = vld [vmem:[#allocation6 + $0x1a8] sm:$0xff]
      %v179 = vld [vmem:[#allocation6 + $0x1b0] sm:$0xff]
      %v180 = vld [vmem:[#allocation6 + $0x1b8] sm:$0xff]
      %v181 = vld [vmem:[#allocation6 + $0x1c0] sm:$0xff]
      %v182 = vld [vmem:[#allocation6 + $0x1c8] sm:$0xff]
      %v183 = vld [vmem:[#allocation6 + $0x1d0] sm:$0xff]
      %v184 = vld [vmem:[#allocation6 + $0x1d8] sm:$0xff]
      %v185 = vld [vmem:[#allocation6 + $0x1e0] sm:$0xff]
      %v186 = vld [vmem:[#allocation6 + $0x1e8] sm:$0xff]
      %v187 = vld [vmem:[#allocation6 + $0x1f0] sm:$0xff]
      %v188 = vld [vmem:[#allocation6 + $0x1f8] sm:$0xff]
      %v189 = vld [vmem:[#allocation6 + $0x200] sm:$0xff]
      %v190 = vld [vmem:[#allocation6 + $0x208] sm:$0xff]
      %v191 = vld [vmem:[#allocation6 + $0x210] sm:$0xff]
      %v192 = vld [vmem:[#allocation6 + $0x218] sm:$0xff]
      %v193 = vld [vmem:[#allocation6 + $0x220] sm:$0xff]
      %v194 = vld [vmem:[#allocation6 + $0x228] sm:$0xff]
      %v195 = vld [vmem:[#allocation6 + $0x230] sm:$0xff]
      %v196 = vld [vmem:[#allocation6 + $0x238] sm:$0xff]
      %v197 = vld [vmem:[#allocation6 + $0x240] sm:$0xff]
      %v198 = vld [vmem:[#allocation6 + $0x248] sm:$0xff]
      %v199 = vld [vmem:[#allocation6 + $0x250] sm:$0xff]
      %v200 = vld [vmem:[#allocation6 + $0x258] sm:$0xff]
      %v201 = vld [vmem:[#allocation6 + $0x260] sm:$0xff]
      %v202 = vld [vmem:[#allocation6 + $0x268] sm:$0xff]
      %v203 = vld [vmem:[#allocation6 + $0x270] sm:$0xff]
      %v204 = vld [vmem:[#allocation6 + $0x278] sm:$0xff]
      %v205 = vld [vmem:[#allocation6 + $0x280] sm:$0xff]
      %v206 = vld [vmem:[#allocation6 + $0x288] sm:$0xff]
      %v207 = vld [vmem:[#allocation6 + $0x290] sm:$0xff]
      %v208 = vld [vmem:[#allocation6 + $0x298] sm:$0xff]
      %v209 = vld [vmem:[#allocation6 + $0x2a0] sm:$0xff]
      %v210 = vld [vmem:[#allocation6 + $0x2a8] sm:$0xff]
      %v211 = vld [vmem:[#allocation6 + $0x2b0] sm:$0xff]
      %v212 = vld [vmem:[#allocation6 + $0x2b8] sm:$0xff]
      %v213 = vld [vmem:[#allocation6 + $0x2c0] sm:$0xff]
      %v214 = vld [vmem:[#allocation6 + $0x2c8] sm:$0xff]
      %v215 = vld [vmem:[#allocation6 + $0x2d0] sm:$0xff]
      %v216 = vld [vmem:[#allocation6 + $0x2d8] sm:$0xff]
      %v217 = vld [vmem:[#allocation6 + $0x2e0] sm:$0xff]
      %v218 = vld [vmem:[#allocation6 + $0x2e8] sm:$0xff]
      %v219 = vld [vmem:[#allocation6 + $0x2f0] sm:$0xff]
      %v220 = vld [vmem:[#allocation6 + $0x2f8] sm:$0xff]
      %v221 = vld [vmem:[#allocation6 + $0x300] sm:$0xff]
      %v222 = vld [vmem:[#allocation6 + $0x308] sm:$0xff]
      %v223 = vld [vmem:[#allocation6 + $0x310] sm:$0xff]
      %v224 = vld [vmem:[#allocation6 + $0x318] sm:$0xff]
      %v225 = vld [vmem:[#allocation6 + $0x320] sm:$0xff]
      %v226 = vld [vmem:[#allocation6 + $0x328] sm:$0xff]
      %v227 = vld [vmem:[#allocation6 + $0x330] sm:$0xff]
      %v228 = vld [vmem:[#allocation6 + $0x338] sm:$0xff]
      %v229 = vld [vmem:[#allocation6 + $0x340] sm:$0xff]
      %v230 = vld [vmem:[#allocation6 + $0x348] sm:$0xff]
      %v231 = vld [vmem:[#allocation6 + $0x350] sm:$0xff]
      %v232 = vld [vmem:[#allocation6 + $0x358] sm:$0xff]
      %v233 = vld [vmem:[#allocation6 + $0x360] sm:$0xff]
      %v234 = vld [vmem:[#allocation6 + $0x368] sm:$0xff]
      %v235 = vld [vmem:[#allocation6 + $0x370] sm:$0xff]
      %v236 = vld [vmem:[#allocation6 + $0x378] sm:$0xff]
      %v237 = vld [vmem:[#allocation6 + $0x380] sm:$0xff]
      %v238 = vld [vmem:[#allocation6 + $0x388] sm:$0xff]
      %v239 = vld [vmem:[#allocation6 + $0x390] sm:$0xff]
      %v240 = vld [vmem:[#allocation6 + $0x398] sm:$0xff]
      %v241 = vld [vmem:[#allocation6 + $0x3a0] sm:$0xff]
      %v242 = vld [vmem:[#allocation6 + $0x3a8] sm:$0xff]
      %v243 = vld [vmem:[#allocation6 + $0x3b0] sm:$0xff]
      %v244 = vld [vmem:[#allocation6 + $0x3b8] sm:$0xff]
      %v245 = vld [vmem:[#allocation6 + $0x3c0] sm:$0xff]
      %v246 = vld [vmem:[#allocation6 + $0x3c8] sm:$0xff]
      %v247 = vld [vmem:[#allocation6 + $0x3d0] sm:$0xff]
      %v248 = vld [vmem:[#allocation6 + $0x3d8] sm:$0xff]
      %v249 = vld [vmem:[#allocation6 + $0x3e0] sm:$0xff]
      %v250 = vld [vmem:[#allocation6 + $0x3e8] sm:$0xff]
      %v251 = vld [vmem:[#allocation6 + $0x3f0] sm:$0xff]
      %v252 = vld [vmem:[#allocation6 + $0x3f8] sm:$0xff]
      %v253 = vld [vmem:[%s2] sm:$0x3]
      %v255 = vlaneseq
      %v256 = vshrl.u32 %v255, 7
      %v257 = vsub.s32 0, %v256
      %v258 = vrot.slane %v253, %v257
      %v259 = vlaneseq
      %v260 = vshrl.u32 %v259, 7
      %v261 = vsub.s32 1, %v260
      %v262 = vrot.slane %v253, %v261
      %v393 = vunpack.c.l.b16 %v125
      %v394 = vunpack.c.h.b16 %v125
      %v395 = vunpack.c.l.b16 %v126
      %v396 = vunpack.c.h.b16 %v126
      %v397 = vunpack.c.l.b16 %v127
      %v398 = vunpack.c.h.b16 %v127
      %v399 = vunpack.c.l.b16 %v128
      %v400 = vunpack.c.h.b16 %v128
      %v401 = vunpack.c.l.b16 %v129
      %v402 = vunpack.c.h.b16 %v129
      %v403 = vunpack.c.l.b16 %v130
      %v404 = vunpack.c.h.b16 %v130
      %v405 = vunpack.c.l.b16 %v131
      %v406 = vunpack.c.h.b16 %v131
      %v407 = vunpack.c.l.b16 %v132
      %v408 = vunpack.c.h.b16 %v132
      %v409 = vunpack.c.l.b16 %v133
      %v410 = vunpack.c.h.b16 %v133
      %v411 = vunpack.c.l.b16 %v134
      %v412 = vunpack.c.h.b16 %v134
      %v413 = vunpack.c.l.b16 %v135
      %v414 = vunpack.c.h.b16 %v135
      %v415 = vunpack.c.l.b16 %v136
      %v416 = vunpack.c.h.b16 %v136
      %v417 = vunpack.c.l.b16 %v137
      %v418 = vunpack.c.h.b16 %v137
      %v419 = vunpack.c.l.b16 %v138
      %v420 = vunpack.c.h.b16 %v138
      %v421 = vunpack.c.l.b16 %v139
      %v422 = vunpack.c.h.b16 %v139
      %v423 = vunpack.c.l.b16 %v140
      %v424 = vunpack.c.h.b16 %v140
      %v425 = vunpack.c.l.b16 %v141
      %v426 = vunpack.c.h.b16 %v141
      %v427 = vunpack.c.l.b16 %v142
      %v428 = vunpack.c.h.b16 %v142
      %v429 = vunpack.c.l.b16 %v143
      %v430 = vunpack.c.h.b16 %v143
      %v431 = vunpack.c.l.b16 %v144
      %v432 = vunpack.c.h.b16 %v144
      %v433 = vunpack.c.l.b16 %v145
      %v434 = vunpack.c.h.b16 %v145
      %v435 = vunpack.c.l.b16 %v146
      %v436 = vunpack.c.h.b16 %v146
      %v437 = vunpack.c.l.b16 %v147
      %v438 = vunpack.c.h.b16 %v147
      %v439 = vunpack.c.l.b16 %v148
      %v440 = vunpack.c.h.b16 %v148
      %v441 = vunpack.c.l.b16 %v149
      %v442 = vunpack.c.h.b16 %v149
      %v443 = vunpack.c.l.b16 %v150
      %v444 = vunpack.c.h.b16 %v150
      %v445 = vunpack.c.l.b16 %v151
      %v446 = vunpack.c.h.b16 %v151
      %v447 = vunpack.c.l.b16 %v152
      %v448 = vunpack.c.h.b16 %v152
      %v449 = vunpack.c.l.b16 %v153
      %v450 = vunpack.c.h.b16 %v153
      %v451 = vunpack.c.l.b16 %v154
      %v452 = vunpack.c.h.b16 %v154
      %v453 = vunpack.c.l.b16 %v155
      %v454 = vunpack.c.h.b16 %v155
      %v455 = vunpack.c.l.b16 %v156
      %v456 = vunpack.c.h.b16 %v156
      %v457 = vunpack.c.l.b16 %v157
      %v458 = vunpack.c.h.b16 %v157
      %v459 = vunpack.c.l.b16 %v158
      %v460 = vunpack.c.h.b16 %v158
      %v461 = vunpack.c.l.b16 %v159
      %v462 = vunpack.c.h.b16 %v159
      %v463 = vunpack.c.l.b16 %v160
      %v464 = vunpack.c.h.b16 %v160
      %v465 = vunpack.c.l.b16 %v161
      %v466 = vunpack.c.h.b16 %v161
      %v467 = vunpack.c.l.b16 %v162
      %v468 = vunpack.c.h.b16 %v162
      %v469 = vunpack.c.l.b16 %v163
      %v470 = vunpack.c.h.b16 %v163
      %v471 = vunpack.c.l.b16 %v164
      %v472 = vunpack.c.h.b16 %v164
      %v473 = vunpack.c.l.b16 %v165
      %v474 = vunpack.c.h.b16 %v165
      %v475 = vunpack.c.l.b16 %v166
      %v476 = vunpack.c.h.b16 %v166
      %v477 = vunpack.c.l.b16 %v167
      %v478 = vunpack.c.h.b16 %v167
      %v479 = vunpack.c.l.b16 %v168
      %v480 = vunpack.c.h.b16 %v168
      %v481 = vunpack.c.l.b16 %v169
      %v482 = vunpack.c.h.b16 %v169
      %v483 = vunpack.c.l.b16 %v170
      %v484 = vunpack.c.h.b16 %v170
      %v485 = vunpack.c.l.b16 %v171
      %v486 = vunpack.c.h.b16 %v171
      %v487 = vunpack.c.l.b16 %v172
      %v488 = vunpack.c.h.b16 %v172
      %v489 = vunpack.c.l.b16 %v173
      %v490 = vunpack.c.h.b16 %v173
      %v491 = vunpack.c.l.b16 %v174
      %v492 = vunpack.c.h.b16 %v174
      %v493 = vunpack.c.l.b16 %v175
      %v494 = vunpack.c.h.b16 %v175
      %v495 = vunpack.c.l.b16 %v176
      %v496 = vunpack.c.h.b16 %v176
      %v497 = vunpack.c.l.b16 %v177
      %v498 = vunpack.c.h.b16 %v177
      %v499 = vunpack.c.l.b16 %v178
      %v500 = vunpack.c.h.b16 %v178
      %v501 = vunpack.c.l.b16 %v179
      %v502 = vunpack.c.h.b16 %v179
      %v503 = vunpack.c.l.b16 %v180
      %v504 = vunpack.c.h.b16 %v180
      %v505 = vunpack.c.l.b16 %v181
      %v506 = vunpack.c.h.b16 %v181
      %v507 = vunpack.c.l.b16 %v182
      %v508 = vunpack.c.h.b16 %v182
      %v509 = vunpack.c.l.b16 %v183
      %v510 = vunpack.c.h.b16 %v183
      %v511 = vunpack.c.l.b16 %v184
      %v512 = vunpack.c.h.b16 %v184
      %v513 = vunpack.c.l.b16 %v185
      %v514 = vunpack.c.h.b16 %v185
      %v515 = vunpack.c.l.b16 %v186
      %v516 = vunpack.c.h.b16 %v186
      %v517 = vunpack.c.l.b16 %v187
      %v518 = vunpack.c.h.b16 %v187
      %v519 = vunpack.c.l.b16 %v188
      %v520 = vunpack.c.h.b16 %v188
      %v521 = vunpack.c.l.b16 %v189
      %v522 = vunpack.c.h.b16 %v189
      %v523 = vunpack.c.l.b16 %v190
      %v524 = vunpack.c.h.b16 %v190
      %v525 = vunpack.c.l.b16 %v191
      %v526 = vunpack.c.h.b16 %v191
      %v527 = vunpack.c.l.b16 %v192
      %v528 = vunpack.c.h.b16 %v192
      %v529 = vunpack.c.l.b16 %v193
      %v530 = vunpack.c.h.b16 %v193
      %v531 = vunpack.c.l.b16 %v194
      %v532 = vunpack.c.h.b16 %v194
      %v533 = vunpack.c.l.b16 %v195
      %v534 = vunpack.c.h.b16 %v195
      %v535 = vunpack.c.l.b16 %v196
      %v536 = vunpack.c.h.b16 %v196
      %v537 = vunpack.c.l.b16 %v197
      %v538 = vunpack.c.h.b16 %v197
      %v539 = vunpack.c.l.b16 %v198
      %v540 = vunpack.c.h.b16 %v198
      %v541 = vunpack.c.l.b16 %v199
      %v542 = vunpack.c.h.b16 %v199
      %v543 = vunpack.c.l.b16 %v200
      %v544 = vunpack.c.h.b16 %v200
      %v545 = vunpack.c.l.b16 %v201
      %v546 = vunpack.c.h.b16 %v201
      %v547 = vunpack.c.l.b16 %v202
      %v548 = vunpack.c.h.b16 %v202
      %v549 = vunpack.c.l.b16 %v203
      %v550 = vunpack.c.h.b16 %v203
      %v551 = vunpack.c.l.b16 %v204
      %v552 = vunpack.c.h.b16 %v204
      %v553 = vunpack.c.l.b16 %v205
      %v554 = vunpack.c.h.b16 %v205
      %v555 = vunpack.c.l.b16 %v206
      %v556 = vunpack.c.h.b16 %v206
      %v557 = vunpack.c.l.b16 %v207
      %v558 = vunpack.c.h.b16 %v207
      %v559 = vunpack.c.l.b16 %v208
      %v560 = vunpack.c.h.b16 %v208
      %v561 = vunpack.c.l.b16 %v209
      %v562 = vunpack.c.h.b16 %v209
      %v563 = vunpack.c.l.b16 %v210
      %v564 = vunpack.c.h.b16 %v210
      %v565 = vunpack.c.l.b16 %v211
      %v566 = vunpack.c.h.b16 %v211
      %v567 = vunpack.c.l.b16 %v212
      %v568 = vunpack.c.h.b16 %v212
      %v569 = vunpack.c.l.b16 %v213
      %v570 = vunpack.c.h.b16 %v213
      %v571 = vunpack.c.l.b16 %v214
      %v572 = vunpack.c.h.b16 %v214
      %v573 = vunpack.c.l.b16 %v215
      %v574 = vunpack.c.h.b16 %v215
      %v575 = vunpack.c.l.b16 %v216
      %v576 = vunpack.c.h.b16 %v216
      %v577 = vunpack.c.l.b16 %v217
      %v578 = vunpack.c.h.b16 %v217
      %v579 = vunpack.c.l.b16 %v218
      %v580 = vunpack.c.h.b16 %v218
      %v581 = vunpack.c.l.b16 %v219
      %v582 = vunpack.c.h.b16 %v219
      %v583 = vunpack.c.l.b16 %v220
      %v584 = vunpack.c.h.b16 %v220
      %v585 = vunpack.c.l.b16 %v221
      %v586 = vunpack.c.h.b16 %v221
      %v587 = vunpack.c.l.b16 %v222
      %v588 = vunpack.c.h.b16 %v222
      %v589 = vunpack.c.l.b16 %v223
      %v590 = vunpack.c.h.b16 %v223
      %v591 = vunpack.c.l.b16 %v224
      %v592 = vunpack.c.h.b16 %v224
      %v593 = vunpack.c.l.b16 %v225
      %v594 = vunpack.c.h.b16 %v225
      %v595 = vunpack.c.l.b16 %v226
      %v596 = vunpack.c.h.b16 %v226
      %v597 = vunpack.c.l.b16 %v227
      %v598 = vunpack.c.h.b16 %v227
      %v599 = vunpack.c.l.b16 %v228
      %v600 = vunpack.c.h.b16 %v228
      %v601 = vunpack.c.l.b16 %v229
      %v602 = vunpack.c.h.b16 %v229
      %v603 = vunpack.c.l.b16 %v230
      %v604 = vunpack.c.h.b16 %v230
      %v605 = vunpack.c.l.b16 %v231
      %v606 = vunpack.c.h.b16 %v231
      %v607 = vunpack.c.l.b16 %v232
      %v608 = vunpack.c.h.b16 %v232
      %v609 = vunpack.c.l.b16 %v233
      %v610 = vunpack.c.h.b16 %v233
      %v611 = vunpack.c.l.b16 %v234
      %v612 = vunpack.c.h.b16 %v234
      %v613 = vunpack.c.l.b16 %v235
      %v614 = vunpack.c.h.b16 %v235
      %v615 = vunpack.c.l.b16 %v236
      %v616 = vunpack.c.h.b16 %v236
      %v617 = vunpack.c.l.b16 %v237
      %v618 = vunpack.c.h.b16 %v237
      %v619 = vunpack.c.l.b16 %v238
      %v620 = vunpack.c.h.b16 %v238
      %v621 = vunpack.c.l.b16 %v239
      %v622 = vunpack.c.h.b16 %v239
      %v623 = vunpack.c.l.b16 %v240
      %v624 = vunpack.c.h.b16 %v240
      %v625 = vunpack.c.l.b16 %v241
      %v626 = vunpack.c.h.b16 %v241
      %v627 = vunpack.c.l.b16 %v242
      %v628 = vunpack.c.h.b16 %v242
      %v629 = vunpack.c.l.b16 %v243
      %v630 = vunpack.c.h.b16 %v243
      %v631 = vunpack.c.l.b16 %v244
      %v632 = vunpack.c.h.b16 %v244
      %v633 = vunpack.c.l.b16 %v245
      %v634 = vunpack.c.h.b16 %v245
      %v635 = vunpack.c.l.b16 %v246
      %v636 = vunpack.c.h.b16 %v246
      %v637 = vunpack.c.l.b16 %v247
      %v638 = vunpack.c.h.b16 %v247
      %v639 = vunpack.c.l.b16 %v248
      %v640 = vunpack.c.h.b16 %v248
      %v641 = vunpack.c.l.b16 %v249
      %v642 = vunpack.c.h.b16 %v249
      %v643 = vunpack.c.l.b16 %v250
      %v644 = vunpack.c.h.b16 %v250
      %v645 = vunpack.c.l.b16 %v251
      %v646 = vunpack.c.h.b16 %v251
      %v647 = vunpack.c.l.b16 %v252
      %v648 = vunpack.c.h.b16 %v252
      %v649 = vpack.c.b16 %v395, %v393
      %v650 = vpack.c.b16 %v396, %v394
      %v651 = vpack.c.b16 %v399, %v397
      %v652 = vpack.c.b16 %v400, %v398
      %v653 = vpack.c.b16 %v403, %v401
      %v654 = vpack.c.b16 %v404, %v402
      %v655 = vpack.c.b16 %v407, %v405
      %v656 = vpack.c.b16 %v408, %v406
      %v657 = vpack.c.b16 %v411, %v409
      %v658 = vpack.c.b16 %v412, %v410
      %v659 = vpack.c.b16 %v415, %v413
      %v660 = vpack.c.b16 %v416, %v414
      %v661 = vpack.c.b16 %v419, %v417
      %v662 = vpack.c.b16 %v420, %v418
      %v663 = vpack.c.b16 %v423, %v421
      %v664 = vpack.c.b16 %v424, %v422
      %v665 = vpack.c.b16 %v427, %v425
      %v666 = vpack.c.b16 %v428, %v426
      %v667 = vpack.c.b16 %v431, %v429
      %v668 = vpack.c.b16 %v432, %v430
      %v669 = vpack.c.b16 %v435, %v433
      %v670 = vpack.c.b16 %v436, %v434
      %v671 = vpack.c.b16 %v439, %v437
      %v672 = vpack.c.b16 %v440, %v438
      %v673 = vpack.c.b16 %v443, %v441
      %v674 = vpack.c.b16 %v444, %v442
      %v675 = vpack.c.b16 %v447, %v445
      %v676 = vpack.c.b16 %v448, %v446
      %v677 = vpack.c.b16 %v451, %v449
      %v678 = vpack.c.b16 %v452, %v450
      %v679 = vpack.c.b16 %v455, %v453
      %v680 = vpack.c.b16 %v456, %v454
      %v681 = vpack.c.b16 %v459, %v457
      %v682 = vpack.c.b16 %v460, %v458
      %v683 = vpack.c.b16 %v463, %v461
      %v684 = vpack.c.b16 %v464, %v462
      %v685 = vpack.c.b16 %v467, %v465
      %v686 = vpack.c.b16 %v468, %v466
      %v687 = vpack.c.b16 %v471, %v469
      %v688 = vpack.c.b16 %v472, %v470
      %v689 = vpack.c.b16 %v475, %v473
      %v690 = vpack.c.b16 %v476, %v474
      %v691 = vpack.c.b16 %v479, %v477
      %v692 = vpack.c.b16 %v480, %v478
      %v693 = vpack.c.b16 %v483, %v481
      %v694 = vpack.c.b16 %v484, %v482
      %v695 = vpack.c.b16 %v487, %v485
      %v696 = vpack.c.b16 %v488, %v486
      %v697 = vpack.c.b16 %v491, %v489
      %v698 = vpack.c.b16 %v492, %v490
      %v699 = vpack.c.b16 %v495, %v493
      %v700 = vpack.c.b16 %v496, %v494
      %v701 = vpack.c.b16 %v499, %v497
      %v702 = vpack.c.b16 %v500, %v498
      %v703 = vpack.c.b16 %v503, %v501
      %v704 = vpack.c.b16 %v504, %v502
      %v705 = vpack.c.b16 %v507, %v505
      %v706 = vpack.c.b16 %v508, %v506
      %v707 = vpack.c.b16 %v511, %v509
      %v708 = vpack.c.b16 %v512, %v510
      %v709 = vpack.c.b16 %v515, %v513
      %v710 = vpack.c.b16 %v516, %v514
      %v711 = vpack.c.b16 %v519, %v517
      %v712 = vpack.c.b16 %v520, %v518
      %v713 = vpack.c.b16 %v523, %v521
      %v714 = vpack.c.b16 %v524, %v522
      %v715 = vpack.c.b16 %v527, %v525
      %v716 = vpack.c.b16 %v528, %v526
      %v717 = vpack.c.b16 %v531, %v529
      %v718 = vpack.c.b16 %v532, %v530
      %v719 = vpack.c.b16 %v535, %v533
      %v720 = vpack.c.b16 %v536, %v534
      %v721 = vpack.c.b16 %v539, %v537
      %v722 = vpack.c.b16 %v540, %v538
      %v723 = vpack.c.b16 %v543, %v541
      %v724 = vpack.c.b16 %v544, %v542
      %v725 = vpack.c.b16 %v547, %v545
      %v726 = vpack.c.b16 %v548, %v546
      %v727 = vpack.c.b16 %v551, %v549
      %v728 = vpack.c.b16 %v552, %v550
      %v729 = vpack.c.b16 %v555, %v553
      %v730 = vpack.c.b16 %v556, %v554
      %v731 = vpack.c.b16 %v559, %v557
      %v732 = vpack.c.b16 %v560, %v558
      %v733 = vpack.c.b16 %v563, %v561
      %v734 = vpack.c.b16 %v564, %v562
      %v735 = vpack.c.b16 %v567, %v565
      %v736 = vpack.c.b16 %v568, %v566
      %v737 = vpack.c.b16 %v571, %v569
      %v738 = vpack.c.b16 %v572, %v570
      %v739 = vpack.c.b16 %v575, %v573
      %v740 = vpack.c.b16 %v576, %v574
      %v741 = vpack.c.b16 %v579, %v577
      %v742 = vpack.c.b16 %v580, %v578
      %v743 = vpack.c.b16 %v583, %v581
      %v744 = vpack.c.b16 %v584, %v582
      %v745 = vpack.c.b16 %v587, %v585
      %v746 = vpack.c.b16 %v588, %v586
      %v747 = vpack.c.b16 %v591, %v589
      %v748 = vpack.c.b16 %v592, %v590
      %v749 = vpack.c.b16 %v595, %v593
      %v750 = vpack.c.b16 %v596, %v594
      %v751 = vpack.c.b16 %v599, %v597
      %v752 = vpack.c.b16 %v600, %v598
      %v753 = vpack.c.b16 %v603, %v601
      %v754 = vpack.c.b16 %v604, %v602
      %v755 = vpack.c.b16 %v607, %v605
      %v756 = vpack.c.b16 %v608, %v606
      %v757 = vpack.c.b16 %v611, %v609
      %v758 = vpack.c.b16 %v612, %v610
      %v759 = vpack.c.b16 %v615, %v613
      %v760 = vpack.c.b16 %v616, %v614
      %v761 = vpack.c.b16 %v619, %v617
      %v762 = vpack.c.b16 %v620, %v618
      %v763 = vpack.c.b16 %v623, %v621
      %v764 = vpack.c.b16 %v624, %v622
      %v765 = vpack.c.b16 %v627, %v625
      %v766 = vpack.c.b16 %v628, %v626
      %v767 = vpack.c.b16 %v631, %v629
      %v768 = vpack.c.b16 %v632, %v630
      %v769 = vpack.c.b16 %v635, %v633
      %v770 = vpack.c.b16 %v636, %v634
      %v771 = vpack.c.b16 %v639, %v637
      %v772 = vpack.c.b16 %v640, %v638
      %v773 = vpack.c.b16 %v643, %v641
      %v774 = vpack.c.b16 %v644, %v642
      %v775 = vpack.c.b16 %v647, %v645
      %v776 = vpack.c.b16 %v648, %v646
      %905 = vmatprep.subr.bf16.mxu0 %v650
      %906 = vmatpush1.bf16.msra.mxu0 %v649
      %907 = vmatprep.subr.bf16.mxu0 %v652
      %908 = vmatpush1.bf16.msra.mxu0 %v651
      %909 = vmatprep.subr.bf16.mxu0 %v654
      %910 = vmatpush1.bf16.msra.mxu0 %v653
      %911 = vmatprep.subr.bf16.mxu0 %v656
      %912 = vmatpush1.bf16.msra.mxu0 %v655
      %913 = vmatprep.subr.bf16.mxu0 %v658
      %914 = vmatpush1.bf16.msra.mxu0 %v657
      %915 = vmatprep.subr.bf16.mxu0 %v660
      %916 = vmatpush1.bf16.msra.mxu0 %v659
      %917 = vmatprep.subr.bf16.mxu0 %v662
      %918 = vmatpush1.bf16.msra.mxu0 %v661
      %919 = vmatprep.subr.bf16.mxu0 %v664
      %920 = vmatpush1.bf16.msra.mxu0 %v663
      %921 = vmatprep.subr.bf16.mxu0 %v666
      %922 = vmatpush1.bf16.msra.mxu0 %v665
      %923 = vmatprep.subr.bf16.mxu0 %v668
      %924 = vmatpush1.bf16.msra.mxu0 %v667
      %925 = vmatprep.subr.bf16.mxu0 %v670
      %926 = vmatpush1.bf16.msra.mxu0 %v669
      %927 = vmatprep.subr.bf16.mxu0 %v672
      %928 = vmatpush1.bf16.msra.mxu0 %v671
      %929 = vmatprep.subr.bf16.mxu0 %v674
      %930 = vmatpush1.bf16.msra.mxu0 %v673
      %931 = vmatprep.subr.bf16.mxu0 %v676
      %932 = vmatpush1.bf16.msra.mxu0 %v675
      %933 = vmatprep.subr.bf16.mxu0 %v678
      %934 = vmatpush1.bf16.msra.mxu0 %v677
      %935 = vmatprep.subr.bf16.mxu0 %v680
      %936 = vmatpush1.bf16.msra.mxu0 %v679
      %937 = vmatprep.mubr.bf16.mxu0 %v118
      %938 = vmatmul.mubr.bf16.gmra.mrb[0].mxu0 %v117
      %v939 = vpop.f32.mrb[0].mxu0
      %v940 = vadd.f32 %v258, %v939
      %v941 = vpop.f32.mrb[0].mxu0
      %v942 = vadd.f32 %v262, %v941
      %v943 = vpop.f32.mrb[0].mxu0
      %v944 = vpop.f32.mrb[0].mxu0
      %945 = vdwg.mxu0
      %946 = vmatprep.subr.bf16.mxu0 %v682
      %947 = vmatpush1.bf16.msra.mxu0 %v681
      %948 = vmatprep.subr.bf16.mxu0 %v684
      %949 = vmatpush1.bf16.msra.mxu0 %v683
      %950 = vmatprep.subr.bf16.mxu0 %v686
      %951 = vmatpush1.bf16.msra.mxu0 %v685
      %952 = vmatprep.subr.bf16.mxu0 %v688
      %953 = vmatpush1.bf16.msra.mxu0 %v687
      %954 = vmatprep.subr.bf16.mxu0 %v690
      %955 = vmatpush1.bf16.msra.mxu0 %v689
      %956 = vmatprep.subr.bf16.mxu0 %v692
      %957 = vmatpush1.bf16.msra.mxu0 %v691
      %958 = vmatprep.subr.bf16.mxu0 %v694
      %959 = vmatpush1.bf16.msra.mxu0 %v693
      %960 = vmatprep.subr.bf16.mxu0 %v696
      %961 = vmatpush1.bf16.msra.mxu0 %v695
      %962 = vmatprep.subr.bf16.mxu0 %v698
      %963 = vmatpush1.bf16.msra.mxu0 %v697
      %964 = vmatprep.subr.bf16.mxu0 %v700
      %965 = vmatpush1.bf16.msra.mxu0 %v699
      %966 = vmatprep.subr.bf16.mxu0 %v702
      %967 = vmatpush1.bf16.msra.mxu0 %v701
      %968 = vmatprep.subr.bf16.mxu0 %v704
      %969 = vmatpush1.bf16.msra.mxu0 %v703
      %970 = vmatprep.subr.bf16.mxu0 %v706
      %971 = vmatpush1.bf16.msra.mxu0 %v705
      %972 = vmatprep.subr.bf16.mxu0 %v708
      %973 = vmatpush1.bf16.msra.mxu0 %v707
      %974 = vmatprep.subr.bf16.mxu0 %v710
      %975 = vmatpush1.bf16.msra.mxu0 %v709
      %976 = vmatprep.subr.bf16.mxu0 %v712
      %977 = vmatpush1.bf16.msra.mxu0 %v711
      %978 = vmatprep.mubr.bf16.mxu0 %v120
      %979 = vmatmul.mubr.bf16.gmra.mrb[0].mxu0 %v119
      %v980 = vpop.f32.mrb[0].mxu0
      %v981 = vadd.f32 %v940, %v980
      %v982 = vpop.f32.mrb[0].mxu0
      %v983 = vadd.f32 %v942, %v982
      %v984 = vpop.f32.mrb[0].mxu0
      %v985 = vpop.f32.mrb[0].mxu0
      %986 = vdwg.mxu0
      %987 = vmatprep.subr.bf16.mxu0 %v714
      %988 = vmatpush1.bf16.msra.mxu0 %v713
      %989 = vmatprep.subr.bf16.mxu0 %v716
      %990 = vmatpush1.bf16.msra.mxu0 %v715
      %991 = vmatprep.subr.bf16.mxu0 %v718
      %992 = vmatpush1.bf16.msra.mxu0 %v717
      %993 = vmatprep.subr.bf16.mxu0 %v720
      %994 = vmatpush1.bf16.msra.mxu0 %v719
      %995 = vmatprep.subr.bf16.mxu0 %v722
      %996 = vmatpush1.bf16.msra.mxu0 %v721
      %997 = vmatprep.subr.bf16.mxu0 %v724
      %998 = vmatpush1.bf16.msra.mxu0 %v723
      %999 = vmatprep.subr.bf16.mxu0 %v726
      %1000 = vmatpush1.bf16.msra.mxu0 %v725
      %1001 = vmatprep.subr.bf16.mxu0 %v728
      %1002 = vmatpush1.bf16.msra.mxu0 %v727
      %1003 = vmatprep.subr.bf16.mxu0 %v730
      %1004 = vmatpush1.bf16.msra.mxu0 %v729
      %1005 = vmatprep.subr.bf16.mxu0 %v732
      %1006 = vmatpush1.bf16.msra.mxu0 %v731
      %1007 = vmatprep.subr.bf16.mxu0 %v734
      %1008 = vmatpush1.bf16.msra.mxu0 %v733
      %1009 = vmatprep.subr.bf16.mxu0 %v736
      %1010 = vmatpush1.bf16.msra.mxu0 %v735
      %1011 = vmatprep.subr.bf16.mxu0 %v738
      %1012 = vmatpush1.bf16.msra.mxu0 %v737
      %1013 = vmatprep.subr.bf16.mxu0 %v740
      %1014 = vmatpush1.bf16.msra.mxu0 %v739
      %1015 = vmatprep.subr.bf16.mxu0 %v742
      %1016 = vmatpush1.bf16.msra.mxu0 %v741
      %1017 = vmatprep.subr.bf16.mxu0 %v744
      %1018 = vmatpush1.bf16.msra.mxu0 %v743
      %1019 = vmatprep.mubr.bf16.mxu0 %v122
      %1020 = vmatmul.mubr.bf16.gmra.mrb[0].mxu0 %v121
      %v1021 = vpop.f32.mrb[0].mxu0
      %v1022 = vadd.f32 %v981, %v1021
      %v1023 = vpop.f32.mrb[0].mxu0
      %v1024 = vadd.f32 %v983, %v1023
      %v1025 = vpop.f32.mrb[0].mxu0
      %v1026 = vpop.f32.mrb[0].mxu0
      %1027 = vdwg.mxu0
      %1028 = vmatprep.subr.bf16.mxu0 %v746
      %1029 = vmatpush1.bf16.msra.mxu0 %v745
      %1030 = vmatprep.subr.bf16.mxu0 %v748
      %1031 = vmatpush1.bf16.msra.mxu0 %v747
      %1032 = vmatprep.subr.bf16.mxu0 %v750
      %1033 = vmatpush1.bf16.msra.mxu0 %v749
      %1034 = vmatprep.subr.bf16.mxu0 %v752
      %1035 = vmatpush1.bf16.msra.mxu0 %v751
      %1036 = vmatprep.subr.bf16.mxu0 %v754
      %1037 = vmatpush1.bf16.msra.mxu0 %v753
      %1038 = vmatprep.subr.bf16.mxu0 %v756
      %1039 = vmatpush1.bf16.msra.mxu0 %v755
      %1040 = vmatprep.subr.bf16.mxu0 %v758
      %1041 = vmatpush1.bf16.msra.mxu0 %v757
      %1042 = vmatprep.subr.bf16.mxu0 %v760
      %1043 = vmatpush1.bf16.msra.mxu0 %v759
      %1044 = vmatprep.subr.bf16.mxu0 %v762
      %1045 = vmatpush1.bf16.msra.mxu0 %v761
      %1046 = vmatprep.subr.bf16.mxu0 %v764
      %1047 = vmatpush1.bf16.msra.mxu0 %v763
      %1048 = vmatprep.subr.bf16.mxu0 %v766
      %1049 = vmatpush1.bf16.msra.mxu0 %v765
      %1050 = vmatprep.subr.bf16.mxu0 %v768
      %1051 = vmatpush1.bf16.msra.mxu0 %v767
      %1052 = vmatprep.subr.bf16.mxu0 %v770
      %1053 = vmatpush1.bf16.msra.mxu0 %v769
      %1054 = vmatprep.subr.bf16.mxu0 %v772
      %1055 = vmatpush1.bf16.msra.mxu0 %v771
      %1056 = vmatprep.subr.bf16.mxu0 %v774
      %1057 = vmatpush1.bf16.msra.mxu0 %v773
      %1058 = vmatprep.subr.bf16.mxu0 %v776
      %1059 = vmatpush1.bf16.msra.mxu0 %v775
      %1060 = vmatprep.mubr.bf16.mxu0 %v124
      %1061 = vmatmul.mubr.bf16.gmra.mrb[0].mxu0 %v123
      %v1062 = vpop.f32.mrb[0].mxu0
      %v1063 = vadd.f32 %v1022, %v1062
      %v1064 = vpop.f32.mrb[0].mxu0
      %v1065 = vadd.f32 %v1024, %v1064
      %v1066 = vpop.f32.mrb[0].mxu0
      %v1067 = vpop.f32.mrb[0].mxu0
      %1068 = vdwg.mxu0
      %v1071 = vcombine.low %v1063, %v1065
      %v1073 = vunpack.c.l.s4 1983009808
      %v1074 = vunpack.c.0.s8 %v1073
      %v1075 = vlaneseq
      %v1076 = vshrl.u32 %v1075, 7
      %v1077 = vsub.s32 %v1074, %v1076
      %v1078 = vrot.slane %v1071, %v1077
      %1080 = vst [vmem:[#allocation10] sm:$0xf] %v1078
      %v1081 = vmul.f32 %v1065, 0.5
      %v1082 = vmul.f32 %v1081, 1.442695
      %v1083 = vpow.pop %v1082
      %v1084 = vld [vmem:[%s5] sm:$0x3]
      %v1085 = vmul.f32 %v1084, %v1083
      %v1086 = vadd.f32 %v1063, %v1085
      %1087 = vst [vmem:[#allocation2] sm:$0x3] %v1086
    $region41: #{tpu_custom_call.1} parent=1 // pred_fallthru
      _
    %v1088 = vld [vmem:[#allocation2] sm:$0x3]
    %v1089 = vpack.c.bf16 %v1088, %v1088
    %v1090 = vld [vmem:[#allocation8] sm:$0xff]
    %v1091 = vld [vmem:[#allocation8 + $0x8] sm:$0xff]
    %v1092 = vld [vmem:[#allocation8 + $0x10] sm:$0xff]
    %v1093 = vld [vmem:[#allocation8 + $0x18] sm:$0xff]
    %v1094 = vld [vmem:[#allocation8 + $0x20] sm:$0xff]
    %v1095 = vld [vmem:[#allocation8 + $0x28] sm:$0xff]
    %v1096 = vld [vmem:[#allocation8 + $0x30] sm:$0xff]
    %v1097 = vld [vmem:[#allocation8 + $0x38] sm:$0xff]
    %v1098 = vld [vmem:[#allocation8 + $0x40] sm:$0xff]
    %v1099 = vld [vmem:[#allocation8 + $0x48] sm:$0xff]
    %v1100 = vld [vmem:[#allocation8 + $0x50] sm:$0xff]
    %v1101 = vld [vmem:[#allocation8 + $0x58] sm:$0xff]
    %v1102 = vld [vmem:[#allocation8 + $0x60] sm:$0xff]
    %v1103 = vld [vmem:[#allocation8 + $0x68] sm:$0xff]
    %v1104 = vld [vmem:[#allocation8 + $0x70] sm:$0xff]
    %v1105 = vld [vmem:[#allocation8 + $0x78] sm:$0xff]
    %v1106 = vld [vmem:[#allocation8 + $0x80] sm:$0xff]
    %v1107 = vld [vmem:[#allocation8 + $0x88] sm:$0xff]
    %v1108 = vld [vmem:[#allocation8 + $0x90] sm:$0xff]
    %v1109 = vld [vmem:[#allocation8 + $0x98] sm:$0xff]
    %v1110 = vld [vmem:[#allocation8 + $0xa0] sm:$0xff]
    %v1111 = vld [vmem:[#allocation8 + $0xa8] sm:$0xff]
    %v1112 = vld [vmem:[#allocation8 + $0xb0] sm:$0xff]
    %v1113 = vld [vmem:[#allocation8 + $0xb8] sm:$0xff]
    %v1114 = vld [vmem:[#allocation8 + $0xc0] sm:$0xff]
    %v1115 = vld [vmem:[#allocation8 + $0xc8] sm:$0xff]
    %v1116 = vld [vmem:[#allocation8 + $0xd0] sm:$0xff]
    %v1117 = vld [vmem:[#allocation8 + $0xd8] sm:$0xff]
    %v1118 = vld [vmem:[#allocation8 + $0xe0] sm:$0xff]
    %v1119 = vld [vmem:[#allocation8 + $0xe8] sm:$0xff]
    %v1120 = vld [vmem:[#allocation8 + $0xf0] sm:$0xff]
    %v1121 = vld [vmem:[#allocation8 + $0xf8] sm:$0xff]
    %v1122 = vld [vmem:[#allocation8 + $0x100] sm:$0xff]
    %v1123 = vld [vmem:[#allocation8 + $0x108] sm:$0xff]
    %v1124 = vld [vmem:[#allocation8 + $0x110] sm:$0xff]
    %v1125 = vld [vmem:[#allocation8 + $0x118] sm:$0xff]
    %v1126 = vld [vmem:[#allocation8 + $0x120] sm:$0xff]
    %v1127 = vld [vmem:[#allocation8 + $0x128] sm:$0xff]
    %v1128 = vld [vmem:[#allocation8 + $0x130] sm:$0xff]
    %v1129 = vld [vmem:[#allocation8 + $0x138] sm:$0xff]
    %v1130 = vld [vmem:[#allocation8 + $0x140] sm:$0xff]
    %v1131 = vld [vmem:[#allocation8 + $0x148] sm:$0xff]
    %v1132 = vld [vmem:[#allocation8 + $0x150] sm:$0xff]
    %v1133 = vld [vmem:[#allocation8 + $0x158] sm:$0xff]
    %v1134 = vld [vmem:[#allocation8 + $0x160] sm:$0xff]
    %v1135 = vld [vmem:[#allocation8 + $0x168] sm:$0xff]
    %v1136 = vld [vmem:[#allocation8 + $0x170] sm:$0xff]
    %v1137 = vld [vmem:[#allocation8 + $0x178] sm:$0xff]
    %v1138 = vld [vmem:[#allocation8 + $0x180] sm:$0xff]
    %v1139 = vld [vmem:[#allocation8 + $0x188] sm:$0xff]
    %v1140 = vld [vmem:[#allocation8 + $0x190] sm:$0xff]
    %v1141 = vld [vmem:[#allocation8 + $0x198] sm:$0xff]
    %v1142 = vld [vmem:[#allocation8 + $0x1a0] sm:$0xff]
    %v1143 = vld [vmem:[#allocation8 + $0x1a8] sm:$0xff]
    %v1144 = vld [vmem:[#allocation8 + $0x1b0] sm:$0xff]
    %v1145 = vld [vmem:[#allocation8 + $0x1b8] sm:$0xff]
    %v1146 = vld [vmem:[#allocation8 + $0x1c0] sm:$0xff]
    %v1147 = vld [vmem:[#allocation8 + $0x1c8] sm:$0xff]
    %v1148 = vld [vmem:[#allocation8 + $0x1d0] sm:$0xff]
    %v1149 = vld [vmem:[#allocation8 + $0x1d8] sm:$0xff]
    %v1150 = vld [vmem:[#allocation8 + $0x1e0] sm:$0xff]
    %v1151 = vld [vmem:[#allocation8 + $0x1e8] sm:$0xff]
    %v1152 = vld [vmem:[#allocation8 + $0x1f0] sm:$0xff]
    %v1153 = vld [vmem:[#allocation8 + $0x1f8] sm:$0xff]
    %v1154 = vld [vmem:[%s4] sm:$0xff]
    %v1156 = vlaneseq
    %v1157 = vshrl.u32 %v1156, 7
    %v1158 = vsub.s32 0, %v1157
    %v1159 = vrot.slane %v1154, %v1158
    %v1160 = vlaneseq
    %v1161 = vshrl.u32 %v1160, 7
    %v1162 = vsub.s32 1, %v1161
    %v1163 = vrot.slane %v1154, %v1162
    %v1164 = vlaneseq
    %v1165 = vshrl.u32 %v1164, 7
    %v1166 = vsub.s32 2, %v1165
    %v1167 = vrot.slane %v1154, %v1166
    %v1168 = vlaneseq
    %v1169 = vshrl.u32 %v1168, 7
    %v1170 = vsub.s32 3, %v1169
    %v1171 = vrot.slane %v1154, %v1170
    %v1172 = vlaneseq
    %v1173 = vshrl.u32 %v1172, 7
    %v1174 = vsub.s32 4, %v1173
    %v1175 = vrot.slane %v1154, %v1174
    %v1176 = vlaneseq
    %v1177 = vshrl.u32 %v1176, 7
    %v1178 = vsub.s32 5, %v1177
    %v1179 = vrot.slane %v1154, %v1178
    %v1180 = vlaneseq
    %v1181 = vshrl.u32 %v1180, 7
    %v1182 = vsub.s32 6, %v1181
    %v1183 = vrot.slane %v1154, %v1182
    %v1184 = vlaneseq
    %v1185 = vshrl.u32 %v1184, 7
    %v1186 = vsub.s32 7, %v1185
    %v1187 = vrot.slane %v1154, %v1186
    %v1260 = vunpack.c.l.b16 %v1090
    %v1261 = vunpack.c.h.b16 %v1090
    %v1262 = vunpack.c.l.b16 %v1091
    %v1263 = vunpack.c.h.b16 %v1091
    %v1264 = vunpack.c.l.b16 %v1092
    %v1265 = vunpack.c.h.b16 %v1092
    %v1266 = vunpack.c.l.b16 %v1093
    %v1267 = vunpack.c.h.b16 %v1093
    %v1268 = vunpack.c.l.b16 %v1094
    %v1269 = vunpack.c.h.b16 %v1094
    %v1270 = vunpack.c.l.b16 %v1095
    %v1271 = vunpack.c.h.b16 %v1095
    %v1272 = vunpack.c.l.b16 %v1096
    %v1273 = vunpack.c.h.b16 %v1096
    %v1274 = vunpack.c.l.b16 %v1097
    %v1275 = vunpack.c.h.b16 %v1097
    %v1276 = vunpack.c.l.b16 %v1098
    %v1277 = vunpack.c.h.b16 %v1098
    %v1278 = vunpack.c.l.b16 %v1099
    %v1279 = vunpack.c.h.b16 %v1099
    %v1280 = vunpack.c.l.b16 %v1100
    %v1281 = vunpack.c.h.b16 %v1100
    %v1282 = vunpack.c.l.b16 %v1101
    %v1283 = vunpack.c.h.b16 %v1101
    %v1284 = vunpack.c.l.b16 %v1102
    %v1285 = vunpack.c.h.b16 %v1102
    %v1286 = vunpack.c.l.b16 %v1103
    %v1287 = vunpack.c.h.b16 %v1103
    %v1288 = vunpack.c.l.b16 %v1104
    %v1289 = vunpack.c.h.b16 %v1104
    %v1290 = vunpack.c.l.b16 %v1105
    %v1291 = vunpack.c.h.b16 %v1105
    %v1292 = vunpack.c.l.b16 %v1106
    %v1293 = vunpack.c.h.b16 %v1106
    %v1294 = vunpack.c.l.b16 %v1107
    %v1295 = vunpack.c.h.b16 %v1107
    %v1296 = vunpack.c.l.b16 %v1108
    %v1297 = vunpack.c.h.b16 %v1108
    %v1298 = vunpack.c.l.b16 %v1109
    %v1299 = vunpack.c.h.b16 %v1109
    %v1300 = vunpack.c.l.b16 %v1110
    %v1301 = vunpack.c.h.b16 %v1110
    %v1302 = vunpack.c.l.b16 %v1111
    %v1303 = vunpack.c.h.b16 %v1111
    %v1304 = vunpack.c.l.b16 %v1112
    %v1305 = vunpack.c.h.b16 %v1112
    %v1306 = vunpack.c.l.b16 %v1113
    %v1307 = vunpack.c.h.b16 %v1113
    %v1308 = vunpack.c.l.b16 %v1114
    %v1309 = vunpack.c.h.b16 %v1114
    %v1310 = vunpack.c.l.b16 %v1115
    %v1311 = vunpack.c.h.b16 %v1115
    %v1312 = vunpack.c.l.b16 %v1116
    %v1313 = vunpack.c.h.b16 %v1116
    %v1314 = vunpack.c.l.b16 %v1117
    %v1315 = vunpack.c.h.b16 %v1117
    %v1316 = vunpack.c.l.b16 %v1118
    %v1317 = vunpack.c.h.b16 %v1118
    %v1318 = vunpack.c.l.b16 %v1119
    %v1319 = vunpack.c.h.b16 %v1119
    %v1320 = vunpack.c.l.b16 %v1120
    %v1321 = vunpack.c.h.b16 %v1120
    %v1322 = vunpack.c.l.b16 %v1121
    %v1323 = vunpack.c.h.b16 %v1121
    %v1324 = vunpack.c.l.b16 %v1122
    %v1325 = vunpack.c.h.b16 %v1122
    %v1326 = vunpack.c.l.b16 %v1123
    %v1327 = vunpack.c.h.b16 %v1123
    %v1328 = vunpack.c.l.b16 %v1124
    %v1329 = vunpack.c.h.b16 %v1124
    %v1330 = vunpack.c.l.b16 %v1125
    %v1331 = vunpack.c.h.b16 %v1125
    %v1332 = vunpack.c.l.b16 %v1126
    %v1333 = vunpack.c.h.b16 %v1126
    %v1334 = vunpack.c.l.b16 %v1127
    %v1335 = vunpack.c.h.b16 %v1127
    %v1336 = vunpack.c.l.b16 %v1128
    %v1337 = vunpack.c.h.b16 %v1128
    %v1338 = vunpack.c.l.b16 %v1129
    %v1339 = vunpack.c.h.b16 %v1129
    %v1340 = vunpack.c.l.b16 %v1130
    %v1341 = vunpack.c.h.b16 %v1130
    %v1342 = vunpack.c.l.b16 %v1131
    %v1343 = vunpack.c.h.b16 %v1131
    %v1344 = vunpack.c.l.b16 %v1132
    %v1345 = vunpack.c.h.b16 %v1132
    %v1346 = vunpack.c.l.b16 %v1133
    %v1347 = vunpack.c.h.b16 %v1133
    %v1348 = vunpack.c.l.b16 %v1134
    %v1349 = vunpack.c.h.b16 %v1134
    %v1350 = vunpack.c.l.b16 %v1135
    %v1351 = vunpack.c.h.b16 %v1135
    %v1352 = vunpack.c.l.b16 %v1136
    %v1353 = vunpack.c.h.b16 %v1136
    %v1354 = vunpack.c.l.b16 %v1137
    %v1355 = vunpack.c.h.b16 %v1137
    %v1356 = vunpack.c.l.b16 %v1138
    %v1357 = vunpack.c.h.b16 %v1138
    %v1358 = vunpack.c.l.b16 %v1139
    %v1359 = vunpack.c.h.b16 %v1139
    %v1360 = vunpack.c.l.b16 %v1140
    %v1361 = vunpack.c.h.b16 %v1140
    %v1362 = vunpack.c.l.b16 %v1141
    %v1363 = vunpack.c.h.b16 %v1141
    %v1364 = vunpack.c.l.b16 %v1142
    %v1365 = vunpack.c.h.b16 %v1142
    %v1366 = vunpack.c.l.b16 %v1143
    %v1367 = vunpack.c.h.b16 %v1143
    %v1368 = vunpack.c.l.b16 %v1144
    %v1369 = vunpack.c.h.b16 %v1144
    %v1370 = vunpack.c.l.b16 %v1145
    %v1371 = vunpack.c.h.b16 %v1145
    %v1372 = vunpack.c.l.b16 %v1146
    %v1373 = vunpack.c.h.b16 %v1146
    %v1374 = vunpack.c.l.b16 %v1147
    %v1375 = vunpack.c.h.b16 %v1147
    %v1376 = vunpack.c.l.b16 %v1148
    %v1377 = vunpack.c.h.b16 %v1148
    %v1378 = vunpack.c.l.b16 %v1149
    %v1379 = vunpack.c.h.b16 %v1149
    %v1380 = vunpack.c.l.b16 %v1150
    %v1381 = vunpack.c.h.b16 %v1150
    %v1382 = vunpack.c.l.b16 %v1151
    %v1383 = vunpack.c.h.b16 %v1151
    %v1384 = vunpack.c.l.b16 %v1152
    %v1385 = vunpack.c.h.b16 %v1152
    %v1386 = vunpack.c.l.b16 %v1153
    %v1387 = vunpack.c.h.b16 %v1153
    %v1388 = vpack.c.b16 %v1268, %v1260
    %v1389 = vpack.c.b16 %v1269, %v1261
    %v1390 = vpack.c.b16 %v1270, %v1262
    %v1391 = vpack.c.b16 %v1271, %v1263
    %v1392 = vpack.c.b16 %v1272, %v1264
    %v1393 = vpack.c.b16 %v1273, %v1265
    %v1394 = vpack.c.b16 %v1274, %v1266
    %v1395 = vpack.c.b16 %v1275, %v1267
    %v1396 = vpack.c.b16 %v1284, %v1276
    %v1397 = vpack.c.b16 %v1285, %v1277
    %v1398 = vpack.c.b16 %v1286, %v1278
    %v1399 = vpack.c.b16 %v1287, %v1279
    %v1400 = vpack.c.b16 %v1288, %v1280
    %v1401 = vpack.c.b16 %v1289, %v1281
    %v1402 = vpack.c.b16 %v1290, %v1282
    %v1403 = vpack.c.b16 %v1291, %v1283
    %v1404 = vpack.c.b16 %v1300, %v1292
    %v1405 = vpack.c.b16 %v1301, %v1293
    %v1406 = vpack.c.b16 %v1302, %v1294
    %v1407 = vpack.c.b16 %v1303, %v1295
    %v1408 = vpack.c.b16 %v1304, %v1296
    %v1409 = vpack.c.b16 %v1305, %v1297
    %v1410 = vpack.c.b16 %v1306, %v1298
    %v1411 = vpack.c.b16 %v1307, %v1299
    %v1412 = vpack.c.b16 %v1316, %v1308
    %v1413 = vpack.c.b16 %v1317, %v1309
    %v1414 = vpack.c.b16 %v1318, %v1310
    %v1415 = vpack.c.b16 %v1319, %v1311
    %v1416 = vpack.c.b16 %v1320, %v1312
    %v1417 = vpack.c.b16 %v1321, %v1313
    %v1418 = vpack.c.b16 %v1322, %v1314
    %v1419 = vpack.c.b16 %v1323, %v1315
    %v1420 = vpack.c.b16 %v1332, %v1324
    %v1421 = vpack.c.b16 %v1333, %v1325
    %v1422 = vpack.c.b16 %v1334, %v1326
    %v1423 = vpack.c.b16 %v1335, %v1327
    %v1424 = vpack.c.b16 %v1336, %v1328
    %v1425 = vpack.c.b16 %v1337, %v1329
    %v1426 = vpack.c.b16 %v1338, %v1330
    %v1427 = vpack.c.b16 %v1339, %v1331
    %v1428 = vpack.c.b16 %v1348, %v1340
    %v1429 = vpack.c.b16 %v1349, %v1341
    %v1430 = vpack.c.b16 %v1350, %v1342
    %v1431 = vpack.c.b16 %v1351, %v1343
    %v1432 = vpack.c.b16 %v1352, %v1344
    %v1433 = vpack.c.b16 %v1353, %v1345
    %v1434 = vpack.c.b16 %v1354, %v1346
    %v1435 = vpack.c.b16 %v1355, %v1347
    %v1436 = vpack.c.b16 %v1364, %v1356
    %v1437 = vpack.c.b16 %v1365, %v1357
    %v1438 = vpack.c.b16 %v1366, %v1358
    %v1439 = vpack.c.b16 %v1367, %v1359
    %v1440 = vpack.c.b16 %v1368, %v1360
    %v1441 = vpack.c.b16 %v1369, %v1361
    %v1442 = vpack.c.b16 %v1370, %v1362
    %v1443 = vpack.c.b16 %v1371, %v1363
    %v1444 = vpack.c.b16 %v1380, %v1372
    %v1445 = vpack.c.b16 %v1381, %v1373
    %v1446 = vpack.c.b16 %v1382, %v1374
    %v1447 = vpack.c.b16 %v1383, %v1375
    %v1448 = vpack.c.b16 %v1384, %v1376
    %v1449 = vpack.c.b16 %v1385, %v1377
    %v1450 = vpack.c.b16 %v1386, %v1378
    %v1451 = vpack.c.b16 %v1387, %v1379
    %1516 = vmatprep.subr.bf16.mxu0 %v1389
    %1517 = vmatpush1.bf16.msra.mxu0 %v1388
    %1518 = vmatprep.subr.bf16.mxu0 %v1397
    %1519 = vmatpush1.bf16.msra.mxu0 %v1396
    %1520 = vmatprep.subr.bf16.mxu0 %v1405
    %1521 = vmatpush1.bf16.msra.mxu0 %v1404
    %1522 = vmatprep.subr.bf16.mxu0 %v1413
    %1523 = vmatpush1.bf16.msra.mxu0 %v1412
    %1524 = vmatprep.subr.bf16.mxu0 %v1421
    %1525 = vmatpush1.bf16.msra.mxu0 %v1420
    %1526 = vmatprep.subr.bf16.mxu0 %v1429
    %1527 = vmatpush1.bf16.msra.mxu0 %v1428
    %1528 = vmatprep.subr.bf16.mxu0 %v1437
    %1529 = vmatpush1.bf16.msra.mxu0 %v1436
    %1530 = vmatprep.subr.bf16.mxu0 %v1445
    %1531 = vmatpush1.bf16.msra.mxu0 %v1444
    %1532 = vmatprep.subr.bf16.mxu0 0
    %1533 = vmatpush1.bf16.msra.mxu0 0
    %1534 = vmatprep.subr.bf16.mxu0 0
    %1535 = vmatpush1.bf16.msra.mxu0 0
    %1536 = vmatprep.subr.bf16.mxu0 0
    %1537 = vmatpush1.bf16.msra.mxu0 0
    %1538 = vmatprep.subr.bf16.mxu0 0
    %1539 = vmatpush1.bf16.msra.mxu0 0
    %1540 = vmatprep.subr.bf16.mxu0 0
    %1541 = vmatpush1.bf16.msra.mxu0 0
    %1542 = vmatprep.subr.bf16.mxu0 0
    %1543 = vmatpush1.bf16.msra.mxu0 0
    %1544 = vmatprep.subr.bf16.mxu0 0
    %1545 = vmatpush1.bf16.msra.mxu0 0
    %1546 = vmatprep.subr.bf16.mxu0 0
    %1547 = vmatpush1.bf16.msra.mxu0 0
    %1548 = vmatprep.mubr.bf16.mxu0 0
    %1549 = vmatmul.mubr.bf16.gmra.mrb[0].mxu0 %v1089
    %v1550 = vpop.f32.mrb[0].mxu0
    %v1551 = vadd.f32 %v1159, %v1550
    %v1552 = vpop.f32.mrb[0].mxu0
    %v1553 = vadd.f32 %v1163, %v1552
    %v1554 = vpop.f32.mrb[0].mxu0
    %v1555 = vpop.f32.mrb[0].mxu0
    %1556 = vdwg.mxu0
    %1557 = vmatprep.subr.bf16.mxu0 %v1391
    %1558 = vmatpush1.bf16.msra.mxu0 %v1390
    %1559 = vmatprep.subr.bf16.mxu0 %v1399
    %1560 = vmatpush1.bf16.msra.mxu0 %v1398
    %1561 = vmatprep.subr.bf16.mxu0 %v1407
    %1562 = vmatpush1.bf16.msra.mxu0 %v1406
    %1563 = vmatprep.subr.bf16.mxu0 %v1415
    %1564 = vmatpush1.bf16.msra.mxu0 %v1414
    %1565 = vmatprep.subr.bf16.mxu0 %v1423
    %1566 = vmatpush1.bf16.msra.mxu0 %v1422
    %1567 = vmatprep.subr.bf16.mxu0 %v1431
    %1568 = vmatpush1.bf16.msra.mxu0 %v1430
    %1569 = vmatprep.subr.bf16.mxu0 %v1439
    %1570 = vmatpush1.bf16.msra.mxu0 %v1438
    %1571 = vmatprep.subr.bf16.mxu0 %v1447
    %1572 = vmatpush1.bf16.msra.mxu0 %v1446
    %1573 = vmatprep.subr.bf16.mxu0 0
    %1574 = vmatpush1.bf16.msra.mxu0 0
    %1575 = vmatprep.subr.bf16.mxu0 0
    %1576 = vmatpush1.bf16.msra.mxu0 0
    %1577 = vmatprep.subr.bf16.mxu0 0
    %1578 = vmatpush1.bf16.msra.mxu0 0
    %1579 = vmatprep.subr.bf16.mxu0 0
    %1580 = vmatpush1.bf16.msra.mxu0 0
    %1581 = vmatprep.subr.bf16.mxu0 0
    %1582 = vmatpush1.bf16.msra.mxu0 0
    %1583 = vmatprep.subr.bf16.mxu0 0
    %1584 = vmatpush1.bf16.msra.mxu0 0
    %1585 = vmatprep.subr.bf16.mxu0 0
    %1586 = vmatpush1.bf16.msra.mxu0 0
    %1587 = vmatprep.subr.bf16.mxu0 0
    %1588 = vmatpush1.bf16.msra.mxu0 0
    %1589 = vmatprep.mubr.bf16.mxu0 0
    %1590 = vmatmul.mubr.bf16.gmra.mrb[0].mxu0 %v1089
    %v1591 = vpop.f32.mrb[0].mxu0
    %v1592 = vadd.f32 %v1167, %v1591
    %v1593 = vpop.f32.mrb[0].mxu0
    %v1594 = vadd.f32 %v1171, %v1593
    %v1595 = vpop.f32.mrb[0].mxu0
    %v1596 = vpop.f32.mrb[0].mxu0
    %1597 = vdwg.mxu0
    %1598 = vmatprep.subr.bf16.mxu0 %v1393
    %1599 = vmatpush1.bf16.msra.mxu0 %v1392
    %1600 = vmatprep.subr.bf16.mxu0 %v1401
    %1601 = vmatpush1.bf16.msra.mxu0 %v1400
    %1602 = vmatprep.subr.bf16.mxu0 %v1409
    %1603 = vmatpush1.bf16.msra.mxu0 %v1408
    %1604 = vmatprep.subr.bf16.mxu0 %v1417
    %1605 = vmatpush1.bf16.msra.mxu0 %v1416
    %1606 = vmatprep.subr.bf16.mxu0 %v1425
    %1607 = vmatpush1.bf16.msra.mxu0 %v1424
    %1608 = vmatprep.subr.bf16.mxu0 %v1433
    %1609 = vmatpush1.bf16.msra.mxu0 %v1432
    %1610 = vmatprep.subr.bf16.mxu0 %v1441
    %1611 = vmatpush1.bf16.msra.mxu0 %v1440
    %1612 = vmatprep.subr.bf16.mxu0 %v1449
    %1613 = vmatpush1.bf16.msra.mxu0 %v1448
    %1614 = vmatprep.subr.bf16.mxu0 0
    %1615 = vmatpush1.bf16.msra.mxu0 0
    %1616 = vmatprep.subr.bf16.mxu0 0
    %1617 = vmatpush1.bf16.msra.mxu0 0
    %1618 = vmatprep.subr.bf16.mxu0 0
    %1619 = vmatpush1.bf16.msra.mxu0 0
    %1620 = vmatprep.subr.bf16.mxu0 0
    %1621 = vmatpush1.bf16.msra.mxu0 0
    %1622 = vmatprep.subr.bf16.mxu0 0
    %1623 = vmatpush1.bf16.msra.mxu0 0
    %1624 = vmatprep.subr.bf16.mxu0 0
    %1625 = vmatpush1.bf16.msra.mxu0 0
    %1626 = vmatprep.subr.bf16.mxu0 0
    %1627 = vmatpush1.bf16.msra.mxu0 0
    %1628 = vmatprep.subr.bf16.mxu0 0
    %1629 = vmatpush1.bf16.msra.mxu0 0
    %1630 = vmatprep.mubr.bf16.mxu0 0
    %1631 = vmatmul.mubr.bf16.gmra.mrb[0].mxu0 %v1089
    %v1632 = vpop.f32.mrb[0].mxu0
    %v1633 = vadd.f32 %v1175, %v1632
    %v1634 = vpop.f32.mrb[0].mxu0
    %v1635 = vadd.f32 %v1179, %v1634
    %v1636 = vpop.f32.mrb[0].mxu0
    %v1637 = vpop.f32.mrb[0].mxu0
    %1638 = vdwg.mxu0
    %1639 = vmatprep.subr.bf16.mxu0 %v1395
    %1640 = vmatpush1.bf16.msra.mxu0 %v1394
    %1641 = vmatprep.subr.bf16.mxu0 %v1403
    %1642 = vmatpush1.bf16.msra.mxu0 %v1402
    %1643 = vmatprep.subr.bf16.mxu0 %v1411
    %1644 = vmatpush1.bf16.msra.mxu0 %v1410
    %1645 = vmatprep.subr.bf16.mxu0 %v1419
    %1646 = vmatpush1.bf16.msra.mxu0 %v1418
    %1647 = vmatprep.subr.bf16.mxu0 %v1427
    %1648 = vmatpush1.bf16.msra.mxu0 %v1426
    %1649 = vmatprep.subr.bf16.mxu0 %v1435
    %1650 = vmatpush1.bf16.msra.mxu0 %v1434
    %1651 = vmatprep.subr.bf16.mxu0 %v1443
    %1652 = vmatpush1.bf16.msra.mxu0 %v1442
    %1653 = vmatprep.subr.bf16.mxu0 %v1451
    %1654 = vmatpush1.bf16.msra.mxu0 %v1450
    %1655 = vmatprep.subr.bf16.mxu0 0
    %1656 = vmatpush1.bf16.msra.mxu0 0
    %1657 = vmatprep.subr.bf16.mxu0 0
    %1658 = vmatpush1.bf16.msra.mxu0 0
    %1659 = vmatprep.subr.bf16.mxu0 0
    %1660 = vmatpush1.bf16.msra.mxu0 0
    %1661 = vmatprep.subr.bf16.mxu0 0
    %1662 = vmatpush1.bf16.msra.mxu0 0
    %1663 = vmatprep.subr.bf16.mxu0 0
    %1664 = vmatpush1.bf16.msra.mxu0 0
    %1665 = vmatprep.subr.bf16.mxu0 0
    %1666 = vmatpush1.bf16.msra.mxu0 0
    %1667 = vmatprep.subr.bf16.mxu0 0
    %1668 = vmatpush1.bf16.msra.mxu0 0
    %1669 = vmatprep.subr.bf16.mxu0 0
    %1670 = vmatpush1.bf16.msra.mxu0 0
    %1671 = vmatprep.mubr.bf16.mxu0 0
    %1672 = vmatmul.mubr.bf16.gmra.mrb[0].mxu0 %v1089
    %v1673 = vpop.f32.mrb[0].mxu0
    %v1674 = vadd.f32 %v1183, %v1673
    %v1675 = vpop.f32.mrb[0].mxu0
    %v1676 = vadd.f32 %v1187, %v1675
    %v1677 = vpop.f32.mrb[0].mxu0
    %v1678 = vpop.f32.mrb[0].mxu0
    %1679 = vdwg.mxu0
    %v1680 = vpack.c.bf16 %v1551, %v1551
    %v1681 = vpack.c.bf16 %v1553, %v1553
    %v1682 = vpack.c.bf16 %v1592, %v1592
    %v1683 = vpack.c.bf16 %v1594, %v1594
    %v1684 = vpack.c.bf16 %v1633, %v1633
    %v1685 = vpack.c.bf16 %v1635, %v1635
    %v1686 = vpack.c.bf16 %v1674, %v1674
    %v1687 = vpack.c.bf16 %v1676, %v1676
    %v1696 = vcombine.low %v1680, %v1681
    %v1697 = vcombine.low %v1682, %v1683
    %v1698 = vcombine.low %v1684, %v1685
    %v1699 = vcombine.low %v1686, %v1687
    %v1701 = vunpack.c.l.s4 1966171168
    %v1702 = vunpack.c.0.s8 %v1701
    %v1703 = vlaneseq
    %v1704 = vshrl.u32 %v1703, 7
    %v1705 = vsub.s32 %v1702, %v1704
    %v1706 = vrot.slane %v1696, %v1705
    %v1708 = vunpack.c.l.s4 1966171168
    %v1709 = vunpack.c.0.s8 %v1708
    %v1710 = vlaneseq
    %v1711 = vshrl.u32 %v1710, 7
    %v1712 = vsub.s32 %v1709, %v1711
    %v1713 = vrot.slane %v1697, %v1712
    %v1715 = vunpack.c.l.s4 1966171168
    %v1716 = vunpack.c.0.s8 %v1715
    %v1717 = vlaneseq
    %v1718 = vshrl.u32 %v1717, 7
    %v1719 = vsub.s32 %v1716, %v1718
    %v1720 = vrot.slane %v1698, %v1719
    %v1722 = vunpack.c.l.s4 1966171168
    %v1723 = vunpack.c.0.s8 %v1722
    %v1724 = vlaneseq
    %v1725 = vshrl.u32 %v1724, 7
    %v1726 = vsub.s32 %v1723, %v1725
    %v1727 = vrot.slane %v1699, %v1726
    %v1728 = vcombine.low %v1706, %v1713
    %v1729 = vcombine.low %v1720, %v1727
    %v1731 = vunpack.c.l.s4 1966171168
    %v1732 = vunpack.c.0.s8 %v1731
    %v1733 = vlaneseq
    %v1734 = vshrl.u32 %v1733, 7
    %v1735 = vsub.s32 %v1732, %v1734
    %v1736 = vrot.slane %v1728, %v1735
    %v1738 = vunpack.c.l.s4 1966171168
    %v1739 = vunpack.c.0.s8 %v1738
    %v1740 = vlaneseq
    %v1741 = vshrl.u32 %v1740, 7
    %v1742 = vsub.s32 %v1739, %v1741
    %v1743 = vrot.slane %v1729, %v1742
    %v1744 = vcombine.low %v1736, %v1743
    %1746 = vst [vmem:[#allocation9] sm:$0xff] %v1744
    // Predicated region
    $region42: #{tpu_custom_call.1} parent=1 // pred_check
      _
    $region43: #{tpu_custom_call.1} parent=1 // pred_check_branch
      %1748 = sbr.rel (0) target = $region45
    $region44: #{tpu_custom_call.1} parent=1 // pred_region
      %s1750 = ssub.s32 128, 128
      %1751 = vsyncadd [#allocation5], %s1750
      %s1753 = sshll.u32 [#allocation9], 4
      %s1754 = int_to_ptr.vmem [resolvable:$true] %s1753
      %1756 = dma.vmem_to_hbm [thread:$0]  %s1754, 128, %s6, [#allocation5]
    $region45: #{tpu_custom_call.1} parent=1 // pred_fallthru
      _
    // Predicated region
    $region46: #{tpu_custom_call.1} parent=1 // pred_check
      _
    $region47: #{tpu_custom_call.1} parent=1 // pred_check_branch
      %1758 = sbr.rel (0) target = $region49
    $region48: #{tpu_custom_call.1} parent=1 // pred_region
      %s1760 = ssub.s32 64, 64
      %1761 = vsyncadd [#allocation11], %s1760
      %s1763 = sshll.u32 [#allocation10], 4
      %s1764 = int_to_ptr.vmem [resolvable:$true] %s1763
      %1766 = dma.vmem_to_hbm [thread:$0]  %s1764, 64, %s7, [#allocation11]
    $region49: #{tpu_custom_call.1} parent=1 // pred_fallthru
      _
    // Predicated region
    $region50: #{tpu_custom_call.1} parent=1 // pred_check
      _
    $region51: #{tpu_custom_call.1} parent=1 // pred_check_branch
      %1768 = sbr.rel (0) target = $region53
    $region52: #{tpu_custom_call.1} parent=1 // pred_region
      %1769 = dma.done [#allocation5], 128
    $region53: #{tpu_custom_call.1} parent=1 // pred_fallthru
      _
    // Predicated region
    $region54: #{tpu_custom_call.1} parent=1 // pred_check
      _
    $region55: #{tpu_custom_call.1} parent=1 // pred_check_branch
      %1771 = sbr.rel (0) target = $region57
    $region56: #{tpu_custom_call.1} parent=1 // pred_region
      %1772 = dma.done [#allocation11], 64
    $region57: #{tpu_custom_call.1} parent=1 // pred_fallthru
      _
    %1773 = vsyncpa [#allocation4], 1
    %1774 = vsyncpa [#allocation7], 1
    %1775 = vsyncpa [#allocation5], 1
    %1776 = vsyncpa [#allocation11], 1

</llo_original>
